<compile_context>
chip_gen: v6e
topology: v6e:2x2x1
jax: 0.10.0
libtpu: 0.0.40
codegen_flags: <defaults>
</compile_context>

<pallas_src>
import functools

import jax
import jax.numpy as jnp
import numpy as np
from jax.experimental import pallas as pl
from jax.experimental.pallas import tpu as pltpu


def _silu(x):
    return x * jax.nn.sigmoid(x)


def fold_bn(gamma, beta, mean, var, eps=1e-5):
    """Eval-mode BatchNorm folded to per-channel scale/bias, returned as (1, C)."""
    scale = gamma / jnp.sqrt(var + eps)
    bias = beta - mean * scale
    return scale.reshape(1, -1), bias.reshape(1, -1)


# ----------------------------- fused MBConv kernel ---------------------------
def _mbconv_kernel(x_ref, wexp_ref, taps_ref, mask_ref, cpack_ref, se1_ref,
                   wproj_ref, pool_ref, bcast_ref, o_ref,
                   *, K, W, BHW, Cmid, Cout, hid_p, use_skip):
    p = (K - 1) // 2
    f32 = jnp.float32

    x = x_ref[...].astype(f32)                                # (Cin, Btile*HW)

    # packed per-channel biases + SE weights (BN scales already folded away)
    b_exp = cpack_ref[:, 0:1]                                 # (Cmid, 1)
    b_dw = cpack_ref[:, 1:2]                                  # (Cmid, 1)
    b_se2 = cpack_ref[:, 2:3]                                 # (Cmid, 1)
    b_proj = cpack_ref[0:Cout, 3:4]                           # (Cout, 1)
    w_se2T = cpack_ref[:, 4:4 + hid_p]                        # (Cmid, hid_p)
    w_se1T = se1_ref[:, 0:Cmid]                               # (hid_p, Cmid)
    b_se1 = se1_ref[:, Cmid:Cmid + 1]                         # (hid_p, 1)

    # -- 1) linear_bottleneck: 1x1 expand conv (MXU, BN scale folded) + SiLU --
    h = jnp.dot(wexp_ref[...], x, preferred_element_type=f32) + b_exp
    h = _silu(h)                                              # (Cmid, Btile*HW)

    # -- 2) depth_wise: KxK depthwise conv, stride 1, same padding --
    # Each tap is a circular lane rotation of the channel-major slab (XLU),
    # times a shared spatial boundary mask (zeros the wrapped / out-of-image
    # lanes, including wraps into the neighbouring image of the batched slab),
    # times the per-channel tap weight (BN scale folded).
    centre = p * K + p
    acc = h * taps_ref[:, centre:centre + 1]                  # centre tap, mask==1
    for dh in range(K):
        for dw in range(K):
            t = dh * K + dw
            if t == centre:
                continue
            shift = (-((dh - p) * W + (dw - p))) % BHW        # jnp.roll convention
            rolled = pltpu.roll(h, shift=shift, axis=1)
            acc = acc + (rolled * mask_ref[t:t + 1, :]) * taps_ref[:, t:t + 1]
    h = _silu(acc + b_dw)                                     # (Cmid, Btile*HW)

    # -- 3) se: per-image squeeze-excitation --
    # Average pool and gate broadcast are MXU matmuls against 0/1 selection
    # matrices (MXU is otherwise idle; keeps the roll-loaded XLU free).
    pooled = jnp.dot(h, pool_ref[...], preferred_element_type=f32)      # (Cmid, Bp)
    s = _silu(jnp.dot(w_se1T, pooled, preferred_element_type=f32) + b_se1)
    gate = jax.nn.sigmoid(jnp.dot(w_se2T, s, preferred_element_type=f32) + b_se2)
    h = h * jnp.dot(gate, bcast_ref[...], preferred_element_type=f32)   # (Cmid, BHW)

    # -- 4) point_wise: 1x1 project conv (MXU, BN scale folded) + residual --
    y = jnp.dot(wproj_ref[...], h, preferred_element_type=f32) + b_proj
    if use_skip:
        y = y + x                    # StochasticDepth(prob=0.0, eval) is identity
    o_ref[...] = y.astype(o_ref.dtype)


# ----------------------- host-side parameter repacking -----------------------
def _prepare_params(params, H, W, Btile, hid_p, b_p):
    """Repack MBConv params for the batched channel-major fused kernel."""
    Cin, Cmid = params["w_exp"].shape
    Cout = params["w_proj"].shape[1]
    hidden = params["w_se1"].shape[1]
    K = params["w_dw"].shape[0]
    p = (K - 1) // 2
    HW = H * W
    f32 = jnp.float32

    s_exp = params["s_exp"].reshape(-1).astype(f32)
    s_dw = params["s_dw"].reshape(-1).astype(f32)
    s_proj = params["s_proj"].reshape(-1).astype(f32)

    # BN scales folded into the output-channel rows of the 1x1 convs (exact).
    w_expT = params["w_exp"].T.astype(f32) * s_exp[:, None]          # (Cmid, Cin)
    w_projT = params["w_proj"].T.astype(f32) * s_proj[:, None]       # (Cout, Cmid)

    # Depthwise per-channel tap weights (BN scale folded): (Cmid, K*K).
    taps = (params["w_dw"].astype(f32) * s_dw[None, None, :])         # (K, K, Cmid)
    taps = taps.reshape(K * K, Cmid).T                                # (Cmid, K*K)

    # Shared spatial boundary mask per tap, tiled per image: (K*K, Btile*HW).
    hh = jnp.arange(H).reshape(H, 1)
    ww = jnp.arange(W).reshape(1, W)
    rows = []
    for dh in range(K):
        for dw in range(K):
            valid = ((hh + dh - p >= 0) & (hh + dh - p < H) &
                     (ww + dw - p >= 0) & (ww + dw - p < W))
            rows.append(jnp.tile(valid.astype(f32).reshape(1, HW), (1, Btile)))
    masks = jnp.concatenate(rows, axis=0)                             # (K*K, BHW)

    # Consolidated per-channel biases + SE fc2 weight: (Cmid, 4 + hid_p).
    b_exp = params["b_exp"].reshape(-1).astype(f32)
    b_dw = params["b_dw"].reshape(-1).astype(f32)
    b_se2 = params["b_se2"].reshape(-1).astype(f32)
    b_proj = params["b_proj"].reshape(-1).astype(f32)
    b_proj_pad = jnp.zeros((Cmid,), f32).at[:Cout].set(b_proj)
    w_se2T = params["w_se2"].T.astype(f32)                            # (Cmid, hidden)
    w_se2T_pad = jnp.zeros((Cmid, hid_p), f32).at[:, :hidden].set(w_se2T)
    cpack = jnp.concatenate([b_exp[:, None], b_dw[:, None], b_se2[:, None],
                             b_proj_pad[:, None], w_se2T_pad], axis=1)

    # SE fc1 [W^T | b], hidden zero-padded to hid_p (exact): (hid_p, Cmid+1).
    w_se1T = params["w_se1"].T.astype(f32)                            # (hidden, Cmid)
    b_se1 = params["b_se1"].reshape(-1).astype(f32)
    w_se1T_pad = jnp.zeros((hid_p, Cmid), f32).at[:hidden].set(w_se1T)
    b_se1_pad = jnp.zeros((hid_p, 1), f32).at[:hidden, 0].set(b_se1)
    se1pack = jnp.concatenate([w_se1T_pad, b_se1_pad], axis=1)

    # Avg-pool / gate-broadcast selection matrices (per-image, zero-padded
    # image slots so every matmul dim is >= 8; padded slots contribute 0).
    img_id = jnp.repeat(jnp.arange(Btile), HW)                        # (BHW,)
    sel = (img_id[:, None] == jnp.arange(b_p)[None, :]).astype(f32)   # (BHW, b_p)
    pool_mat = sel / HW
    bcast_mat = sel.T                                                 # (b_p, BHW)

    return dict(w_expT=w_expT, taps=taps, masks=masks, cpack=cpack,
                se1pack=se1pack, w_projT=w_projT,
                pool_mat=pool_mat, bcast_mat=bcast_mat)


def _pick_btile(N, max_images_per_tile):
    for bt in range(min(N, max_images_per_tile), 0, -1):
        if N % bt == 0:
            return bt
    return 1


def mbconv_forward(x_nchw, params, *, max_images_per_tile=8):
    """MBConv forward (non-fused path, stride=1, eval mode). NCHW in / NCHW out."""
    N, Cin, H, W = x_nchw.shape
    HW = H * W
    Cmid = params["w_exp"].shape[1]
    Cout = params["w_proj"].shape[1]
    K = params["w_dw"].shape[0]
    hidden = params["w_se1"].shape[1]
    use_skip = (Cin == Cout)                    # stride == 1 in this kernel

    # Whole images per grid step (overhead amortization + lane-dense stores).
    # On v7x prefer grid length >= 2 via max_images_per_tile if batch allows.
    Btile = _pick_btile(N, max_images_per_tile)
    BHW = Btile * HW
    grid_n = N // Btile
    hid_p = max(hidden, 8)
    b_p = max(Btile, 8)

    # channel-major slab, columns ordered (image, pixel): (Cin, N*HW)
    x_cm = jnp.transpose(x_nchw.reshape(N, Cin, HW), (1, 0, 2)).reshape(Cin, N * HW)

    w = _prepare_params(params, H, W, Btile, hid_p, b_p)

    kern = functools.partial(_mbconv_kernel, K=K, W=W, BHW=BHW, Cmid=Cmid,
                             Cout=Cout, hid_p=hid_p, use_skip=use_skip)
    const = lambda n: (0, 0)
    in_specs = [
        pl.BlockSpec((Cin, BHW), lambda n: (0, n)),        # x: Btile whole images
        pl.BlockSpec((Cmid, Cin), const),                  # expand W^T (scale folded)
        pl.BlockSpec((Cmid, K * K), const),                # depthwise tap weights
        pl.BlockSpec((K * K, BHW), const),                 # shared boundary masks
        pl.BlockSpec((Cmid, 4 + hid_p), const),            # packed biases + SE fc2 W^T
        pl.BlockSpec((hid_p, Cmid + 1), const),            # SE fc1 [W^T | b]
        pl.BlockSpec((Cout, Cmid), const),                 # project W^T (scale folded)
        pl.BlockSpec((BHW, b_p), const),                   # avg-pool selection matrix
        pl.BlockSpec((b_p, BHW), const),                   # per-image gate broadcast
    ]
    out_spec = pl.BlockSpec((Cout, BHW), lambda n: (0, n))

    out_cm = pl.pallas_call(
        kern,
        grid=(grid_n,),
        in_specs=in_specs,
        out_specs=out_spec,
        out_shape=jax.ShapeDtypeStruct((Cout, N * HW), x_nchw.dtype),
        compiler_params=pltpu.CompilerParams(
            dimension_semantics=("parallel",)),            # v7x: split across 2 TCs
    )(x_cm, w["w_expT"], w["taps"], w["masks"], w["cpack"], w["se1pack"],
      w["w_projT"], w["pool_mat"], w["bcast_mat"])

    return jnp.transpose(out_cm.reshape(Cout, N, HW), (1, 0, 2)).reshape(N, Cout, H, W)


# ------------- pure-JAX reference (same math, no Pallas) for checking --------
def mbconv_reference(x_nchw, params):
    N, Cin, H, W = x_nchw.shape
    Cout = params["w_proj"].shape[1]
    x = jnp.transpose(x_nchw, (0, 2, 3, 1))
    Cmid = params["w_exp"].shape[1]
    h = x.reshape(N * H * W, Cin) @ params["w_exp"] * params["s_exp"] + params["b_exp"]
    h = _silu(h).reshape(N, H, W, Cmid)
    K = params["w_dw"].shape[0]
    p = (K - 1) // 2
    xp = jnp.pad(h, ((0, 0), (p, p), (p, p), (0, 0)))
    acc = jnp.zeros_like(h)
    for dh in range(K):
        for dw in range(K):
            acc = acc + xp[:, dh:dh + H, dw:dw + W, :] * params["w_dw"][dh, dw, :]
    h = _silu(acc * params["s_dw"] + params["b_dw"])
    pooled = jnp.mean(h, axis=(1, 2))
    s = _silu(pooled @ params["w_se1"] + params["b_se1"])
    gate = jax.nn.sigmoid(s @ params["w_se2"] + params["b_se2"])
    h = h * gate[:, None, None, :]
    y = h.reshape(N * H * W, Cmid) @ params["w_proj"] * params["s_proj"] + params["b_proj"]
    if Cin == Cout:
        y = x.reshape(N * H * W, Cin) + y
    return jnp.transpose(y.reshape(N, H, W, -1), (0, 3, 1, 2))


if __name__ == "__main__":
    # Config: N=2, in_ch=out_ch=8, H=W=16, expand_ratio=4 -> Cmid=32, kernel=3,
    # stride=1, se_hidden = Cmid // (4*expand_ratio) = 2, sd_prob=0.0.
    N, Cin, H, W = 2, 8, 16, 16
    expand_ratio, K = 4, 3
    Cmid = Cin * expand_ratio
    Cout = Cin
    se_hidden = Cmid // (4 * expand_ratio)

    key = jax.random.PRNGKey(0)
    ks = jax.random.split(key, 16)
    f32 = jnp.float32

    x = jax.random.normal(ks[0], (N, Cin, H, W), f32)

    def bn_params(k, c):
        k1, k2, k3, k4 = jax.random.split(k, 4)
        gamma = 1.0 + 0.1 * jax.random.normal(k1, (c,), f32)
        beta = 0.1 * jax.random.normal(k2, (c,), f32)
        mean = 0.1 * jax.random.normal(k3, (c,), f32)
        var = 1.0 + 0.1 * jax.random.uniform(k4, (c,), f32)
        return fold_bn(gamma, beta, mean, var)

    s_exp, b_exp = bn_params(ks[1], Cmid)
    s_dw, b_dw = bn_params(ks[2], Cmid)
    s_proj, b_proj = bn_params(ks[3], Cout)

    params = dict(
        # 1x1 expand conv: torch weight (Cmid, Cin, 1, 1) -> matmul weight (Cin, Cmid)
        w_exp=0.2 * jax.random.normal(ks[4], (Cin, Cmid), f32),
        s_exp=s_exp, b_exp=b_exp,
        # depthwise conv: torch weight (Cmid, 1, K, K) -> (K, K, Cmid)
        w_dw=0.2 * jax.random.normal(ks[5], (K, K, Cmid), f32),
        s_dw=s_dw, b_dw=b_dw,
        # SE fc1 (Cmid -> hidden), fc2 (hidden -> Cmid), with bias
        w_se1=0.2 * jax.random.normal(ks[6], (Cmid, se_hidden), f32),
        b_se1=0.1 * jax.random.normal(ks[7], (1, se_hidden), f32),
        w_se2=0.2 * jax.random.normal(ks[8], (se_hidden, Cmid), f32),
        b_se2=0.1 * jax.random.normal(ks[9], (1, Cmid), f32),
        # 1x1 project conv: torch weight (Cout, Cmid, 1, 1) -> (Cmid, Cout)
        w_proj=0.2 * jax.random.normal(ks[10], (Cmid, Cout), f32),
        s_proj=s_proj, b_proj=b_proj,
    )

    out = jax.jit(mbconv_forward)(x, params)
    out = jax.block_until_ready(out)

    ref = jax.block_until_ready(mbconv_reference(x, params))
    assert out.shape == (N, Cout, H, W), out.shape
    np.testing.assert_allclose(np.asarray(out), np.asarray(ref), rtol=2e-3, atol=2e-3)

    print("KERNEL_OK")
</pallas_src>

<mosaic_0001>
module attributes {stable_mosaic.version = 11 : i64} {
  func.func @_mbconv_kernel(%arg0: i32, %arg1: memref<8x512xf32, #tpu.memory_space<vmem>>, %arg2: memref<32x8xf32, #tpu.memory_space<vmem>>, %arg3: memref<32x9xf32, #tpu.memory_space<vmem>>, %arg4: memref<9x512xf32, #tpu.memory_space<vmem>>, %arg5: memref<32x12xf32, #tpu.memory_space<vmem>>, %arg6: memref<8x33xf32, #tpu.memory_space<vmem>>, %arg7: memref<8x32xf32, #tpu.memory_space<vmem>>, %arg8: memref<512x8xf32, #tpu.memory_space<vmem>>, %arg9: memref<8x512xf32, #tpu.memory_space<vmem>>, %arg10: memref<8x512xf32, #tpu.memory_space<vmem>>) attributes {dimension_semantics = [#tpu.dimension_semantics<parallel>], iteration_bounds = array<i64: 1>, scalar_prefetch = 0 : i64, scratch_operands = 0 : i64, tpu.core_type = #tpu.core_type<tc>, window_params = [{transform_indices = @transform_0, window_bounds = array<i64: 8, 512>}, {pipeline_mode = #tpu.pipeline_mode<synchronous>, transform_indices = @transform_1, window_bounds = array<i64: 32, 8>}, {pipeline_mode = #tpu.pipeline_mode<synchronous>, transform_indices = @transform_2, window_bounds = array<i64: 32, 9>}, {pipeline_mode = #tpu.pipeline_mode<synchronous>, transform_indices = @transform_3, window_bounds = array<i64: 9, 512>}, {pipeline_mode = #tpu.pipeline_mode<synchronous>, transform_indices = @transform_4, window_bounds = array<i64: 32, 12>}, {pipeline_mode = #tpu.pipeline_mode<synchronous>, transform_indices = @transform_5, window_bounds = array<i64: 8, 33>}, {pipeline_mode = #tpu.pipeline_mode<synchronous>, transform_indices = @transform_6, window_bounds = array<i64: 8, 32>}, {pipeline_mode = #tpu.pipeline_mode<synchronous>, transform_indices = @transform_7, window_bounds = array<i64: 512, 8>}, {pipeline_mode = #tpu.pipeline_mode<synchronous>, transform_indices = @transform_8, window_bounds = array<i64: 8, 512>}, {transform_indices = @transform_9, window_bounds = array<i64: 8, 512>}]} {
    %c0 = arith.constant 0 : index
    %c0_0 = arith.constant 0 : index
    %0 = vector.load %arg1[%c0, %c0_0] : memref<8x512xf32, #tpu.memory_space<vmem>>, vector<8x512xf32>
    %c0_1 = arith.constant 0 : index
    %c0_2 = arith.constant 0 : index
    %1 = vector.load %arg5[%c0_1, %c0_2] : memref<32x12xf32, #tpu.memory_space<vmem>>, vector<32x1xf32>
    %c0_3 = arith.constant 0 : index
    %c1 = arith.constant 1 : index
    %2 = vector.load %arg5[%c0_3, %c1] : memref<32x12xf32, #tpu.memory_space<vmem>>, vector<32x1xf32>
    %c0_4 = arith.constant 0 : index
    %c2 = arith.constant 2 : index
    %3 = vector.load %arg5[%c0_4, %c2] : memref<32x12xf32, #tpu.memory_space<vmem>>, vector<32x1xf32>
    %c0_5 = arith.constant 0 : index
    %c3 = arith.constant 3 : index
    %4 = vector.load %arg5[%c0_5, %c3] : memref<32x12xf32, #tpu.memory_space<vmem>>, vector<8x1xf32>
    %c0_6 = arith.constant 0 : index
    %c4 = arith.constant 4 : index
    %5 = vector.load %arg5[%c0_6, %c4] : memref<32x12xf32, #tpu.memory_space<vmem>>, vector<32x8xf32>
    %c0_7 = arith.constant 0 : index
    %c0_8 = arith.constant 0 : index
    %6 = vector.load %arg6[%c0_7, %c0_8] : memref<8x33xf32, #tpu.memory_space<vmem>>, vector<8x32xf32>
    %c0_9 = arith.constant 0 : index
    %c32 = arith.constant 32 : index
    %7 = vector.load %arg6[%c0_9, %c32] : memref<8x33xf32, #tpu.memory_space<vmem>>, vector<8x1xf32>
    %c0_10 = arith.constant 0 : index
    %c0_11 = arith.constant 0 : index
    %8 = vector.load %arg2[%c0_10, %c0_11] : memref<32x8xf32, #tpu.memory_space<vmem>>, vector<32x8xf32>
    %cst = arith.constant dense<0.000000e+00> : vector<32x512xf32>
    %9 = tpu.matmul %8, %0, %cst {dimension_numbers = #tpu.dot_dimension_numbers<[1], [0], [0], [1], [0, 0, 1, 1], [], []>} : vector<32x8xf32>, vector<8x512xf32>, vector<32x512xf32> -> vector<32x512xf32>
    %10 = vector.broadcast %1 : vector<32x1xf32> to vector<32x512xf32>
    %11 = arith.addf %9, %10 : vector<32x512xf32>
    %12 = arith.negf %11 : vector<32x512xf32>
    %13 = math.exp %12 : vector<32x512xf32>
    %cst_12 = arith.constant 1.000000e+00 : f32
    %14 = vector.broadcast %cst_12 : f32 to vector<32x512xf32>
    %15 = arith.addf %14, %13 : vector<32x512xf32>
    %16 = arith.divf %14, %15 : vector<32x512xf32>
    %17 = arith.mulf %11, %16 : vector<32x512xf32>
    %c0_13 = arith.constant 0 : index
    %c4_14 = arith.constant 4 : index
    %18 = vector.load %arg3[%c0_13, %c4_14] : memref<32x9xf32, #tpu.memory_space<vmem>>, vector<32x1xf32>
    %19 = vector.broadcast %18 : vector<32x1xf32> to vector<32x512xf32>
    %20 = arith.mulf %17, %19 : vector<32x512xf32>
    %c17_i32 = arith.constant 17 : i32
    %21 = tpu.dynamic_rotate %17 by %c17_i32 dim 1 : vector<32x512xf32>, i32 -> vector<32x512xf32>
    %c0_15 = arith.constant 0 : index
    %c0_16 = arith.constant 0 : index
    %22 = vector.load %arg4[%c0_15, %c0_16] : memref<9x512xf32, #tpu.memory_space<vmem>>, vector<1x512xf32>
    %23 = vector.broadcast %22 : vector<1x512xf32> to vector<32x512xf32>
    %24 = arith.mulf %21, %23 : vector<32x512xf32>
    %c0_17 = arith.constant 0 : index
    %c0_18 = arith.constant 0 : index
    %25 = vector.load %arg3[%c0_17, %c0_18] : memref<32x9xf32, #tpu.memory_space<vmem>>, vector<32x1xf32>
    %26 = vector.broadcast %25 : vector<32x1xf32> to vector<32x512xf32>
    %27 = arith.mulf %24, %26 : vector<32x512xf32>
    %28 = arith.addf %20, %27 : vector<32x512xf32>
    %c16_i32 = arith.constant 16 : i32
    %29 = tpu.dynamic_rotate %17 by %c16_i32 dim 1 : vector<32x512xf32>, i32 -> vector<32x512xf32>
    %c1_19 = arith.constant 1 : index
    %c0_20 = arith.constant 0 : index
    %30 = vector.load %arg4[%c1_19, %c0_20] : memref<9x512xf32, #tpu.memory_space<vmem>>, vector<1x512xf32>
    %31 = vector.broadcast %30 : vector<1x512xf32> to vector<32x512xf32>
    %32 = arith.mulf %29, %31 : vector<32x512xf32>
    %c0_21 = arith.constant 0 : index
    %c1_22 = arith.constant 1 : index
    %33 = vector.load %arg3[%c0_21, %c1_22] : memref<32x9xf32, #tpu.memory_space<vmem>>, vector<32x1xf32>
    %34 = vector.broadcast %33 : vector<32x1xf32> to vector<32x512xf32>
    %35 = arith.mulf %32, %34 : vector<32x512xf32>
    %36 = arith.addf %28, %35 : vector<32x512xf32>
    %c15_i32 = arith.constant 15 : i32
    %37 = tpu.dynamic_rotate %17 by %c15_i32 dim 1 : vector<32x512xf32>, i32 -> vector<32x512xf32>
    %c2_23 = arith.constant 2 : index
    %c0_24 = arith.constant 0 : index
    %38 = vector.load %arg4[%c2_23, %c0_24] : memref<9x512xf32, #tpu.memory_space<vmem>>, vector<1x512xf32>
    %39 = vector.broadcast %38 : vector<1x512xf32> to vector<32x512xf32>
    %40 = arith.mulf %37, %39 : vector<32x512xf32>
    %c0_25 = arith.constant 0 : index
    %c2_26 = arith.constant 2 : index
    %41 = vector.load %arg3[%c0_25, %c2_26] : memref<32x9xf32, #tpu.memory_space<vmem>>, vector<32x1xf32>
    %42 = vector.broadcast %41 : vector<32x1xf32> to vector<32x512xf32>
    %43 = arith.mulf %40, %42 : vector<32x512xf32>
    %44 = arith.addf %36, %43 : vector<32x512xf32>
    %c1_i32 = arith.constant 1 : i32
    %45 = tpu.dynamic_rotate %17 by %c1_i32 dim 1 : vector<32x512xf32>, i32 -> vector<32x512xf32>
    %c3_27 = arith.constant 3 : index
    %c0_28 = arith.constant 0 : index
    %46 = vector.load %arg4[%c3_27, %c0_28] : memref<9x512xf32, #tpu.memory_space<vmem>>, vector<1x512xf32>
    %47 = vector.broadcast %46 : vector<1x512xf32> to vector<32x512xf32>
    %48 = arith.mulf %45, %47 : vector<32x512xf32>
    %c0_29 = arith.constant 0 : index
    %c3_30 = arith.constant 3 : index
    %49 = vector.load %arg3[%c0_29, %c3_30] : memref<32x9xf32, #tpu.memory_space<vmem>>, vector<32x1xf32>
    %50 = vector.broadcast %49 : vector<32x1xf32> to vector<32x512xf32>
    %51 = arith.mulf %48, %50 : vector<32x512xf32>
    %52 = arith.addf %44, %51 : vector<32x512xf32>
    %c511_i32 = arith.constant 511 : i32
    %53 = tpu.dynamic_rotate %17 by %c511_i32 dim 1 : vector<32x512xf32>, i32 -> vector<32x512xf32>
    %c5 = arith.constant 5 : index
    %c0_31 = arith.constant 0 : index
    %54 = vector.load %arg4[%c5, %c0_31] : memref<9x512xf32, #tpu.memory_space<vmem>>, vector<1x512xf32>
    %55 = vector.broadcast %54 : vector<1x512xf32> to vector<32x512xf32>
    %56 = arith.mulf %53, %55 : vector<32x512xf32>
    %c0_32 = arith.constant 0 : index
    %c5_33 = arith.constant 5 : index
    %57 = vector.load %arg3[%c0_32, %c5_33] : memref<32x9xf32, #tpu.memory_space<vmem>>, vector<32x1xf32>
    %58 = vector.broadcast %57 : vector<32x1xf32> to vector<32x512xf32>
    %59 = arith.mulf %56, %58 : vector<32x512xf32>
    %60 = arith.addf %52, %59 : vector<32x512xf32>
    %c497_i32 = arith.constant 497 : i32
    %61 = tpu.dynamic_rotate %17 by %c497_i32 dim 1 : vector<32x512xf32>, i32 -> vector<32x512xf32>
    %c6 = arith.constant 6 : index
    %c0_34 = arith.constant 0 : index
    %62 = vector.load %arg4[%c6, %c0_34] : memref<9x512xf32, #tpu.memory_space<vmem>>, vector<1x512xf32>
    %63 = vector.broadcast %62 : vector<1x512xf32> to vector<32x512xf32>
    %64 = arith.mulf %61, %63 : vector<32x512xf32>
    %c0_35 = arith.constant 0 : index
    %c6_36 = arith.constant 6 : index
    %65 = vector.load %arg3[%c0_35, %c6_36] : memref<32x9xf32, #tpu.memory_space<vmem>>, vector<32x1xf32>
    %66 = vector.broadcast %65 : vector<32x1xf32> to vector<32x512xf32>
    %67 = arith.mulf %64, %66 : vector<32x512xf32>
    %68 = arith.addf %60, %67 : vector<32x512xf32>
    %c496_i32 = arith.constant 496 : i32
    %69 = tpu.dynamic_rotate %17 by %c496_i32 dim 1 : vector<32x512xf32>, i32 -> vector<32x512xf32>
    %c7 = arith.constant 7 : index
    %c0_37 = arith.constant 0 : index
    %70 = vector.load %arg4[%c7, %c0_37] : memref<9x512xf32, #tpu.memory_space<vmem>>, vector<1x512xf32>
    %71 = vector.broadcast %70 : vector<1x512xf32> to vector<32x512xf32>
    %72 = arith.mulf %69, %71 : vector<32x512xf32>
    %c0_38 = arith.constant 0 : index
    %c7_39 = arith.constant 7 : index
    %73 = vector.load %arg3[%c0_38, %c7_39] : memref<32x9xf32, #tpu.memory_space<vmem>>, vector<32x1xf32>
    %74 = vector.broadcast %73 : vector<32x1xf32> to vector<32x512xf32>
    %75 = arith.mulf %72, %74 : vector<32x512xf32>
    %76 = arith.addf %68, %75 : vector<32x512xf32>
    %c495_i32 = arith.constant 495 : i32
    %77 = tpu.dynamic_rotate %17 by %c495_i32 dim 1 : vector<32x512xf32>, i32 -> vector<32x512xf32>
    %c8 = arith.constant 8 : index
    %c0_40 = arith.constant 0 : index
    %78 = vector.load %arg4[%c8, %c0_40] : memref<9x512xf32, #tpu.memory_space<vmem>>, vector<1x512xf32>
    %79 = vector.broadcast %78 : vector<1x512xf32> to vector<32x512xf32>
    %80 = arith.mulf %77, %79 : vector<32x512xf32>
    %c0_41 = arith.constant 0 : index
    %c8_42 = arith.constant 8 : index
    %81 = vector.load %arg3[%c0_41, %c8_42] : memref<32x9xf32, #tpu.memory_space<vmem>>, vector<32x1xf32>
    %82 = vector.broadcast %81 : vector<32x1xf32> to vector<32x512xf32>
    %83 = arith.mulf %80, %82 : vector<32x512xf32>
    %84 = arith.addf %76, %83 : vector<32x512xf32>
    %85 = vector.broadcast %2 : vector<32x1xf32> to vector<32x512xf32>
    %86 = arith.addf %84, %85 : vector<32x512xf32>
    %87 = arith.negf %86 : vector<32x512xf32>
    %88 = math.exp %87 : vector<32x512xf32>
    %cst_43 = arith.constant 1.000000e+00 : f32
    %89 = vector.broadcast %cst_43 : f32 to vector<32x512xf32>
    %90 = arith.addf %89, %88 : vector<32x512xf32>
    %91 = arith.divf %89, %90 : vector<32x512xf32>
    %92 = arith.mulf %86, %91 : vector<32x512xf32>
    %c0_44 = arith.constant 0 : index
    %c0_45 = arith.constant 0 : index
    %93 = vector.load %arg8[%c0_44, %c0_45] : memref<512x8xf32, #tpu.memory_space<vmem>>, vector<512x8xf32>
    %cst_46 = arith.constant dense<0.000000e+00> : vector<32x8xf32>
    %94 = tpu.matmul %92, %93, %cst_46 {dimension_numbers = #tpu.dot_dimension_numbers<[1], [0], [0], [1], [0, 0, 1, 1], [], []>} : vector<32x512xf32>, vector<512x8xf32>, vector<32x8xf32> -> vector<32x8xf32>
    %cst_47 = arith.constant dense<0.000000e+00> : vector<8x8xf32>
    %95 = tpu.matmul %6, %94, %cst_47 {dimension_numbers = #tpu.dot_dimension_numbers<[1], [0], [0], [1], [0, 0, 1, 1], [], []>} : vector<8x32xf32>, vector<32x8xf32>, vector<8x8xf32> -> vector<8x8xf32>
    %96 = vector.broadcast %7 : vector<8x1xf32> to vector<8x8xf32>
    %97 = arith.addf %95, %96 : vector<8x8xf32>
    %98 = arith.negf %97 : vector<8x8xf32>
    %99 = math.exp %98 : vector<8x8xf32>
    %cst_48 = arith.constant 1.000000e+00 : f32
    %100 = vector.broadcast %cst_48 : f32 to vector<8x8xf32>
    %101 = arith.addf %100, %99 : vector<8x8xf32>
    %102 = arith.divf %100, %101 : vector<8x8xf32>
    %103 = arith.mulf %97, %102 : vector<8x8xf32>
    %cst_49 = arith.constant dense<0.000000e+00> : vector<32x8xf32>
    %104 = tpu.matmul %5, %103, %cst_49 {dimension_numbers = #tpu.dot_dimension_numbers<[1], [0], [0], [1], [0, 0, 1, 1], [], []>} : vector<32x8xf32>, vector<8x8xf32>, vector<32x8xf32> -> vector<32x8xf32>
    %105 = vector.broadcast %3 : vector<32x1xf32> to vector<32x8xf32>
    %106 = arith.addf %104, %105 : vector<32x8xf32>
    %107 = arith.negf %106 : vector<32x8xf32>
    %108 = math.exp %107 : vector<32x8xf32>
    %cst_50 = arith.constant 1.000000e+00 : f32
    %109 = vector.broadcast %cst_50 : f32 to vector<32x8xf32>
    %110 = arith.addf %109, %108 : vector<32x8xf32>
    %111 = arith.divf %109, %110 : vector<32x8xf32>
    %c0_51 = arith.constant 0 : index
    %c0_52 = arith.constant 0 : index
    %112 = vector.load %arg9[%c0_51, %c0_52] : memref<8x512xf32, #tpu.memory_space<vmem>>, vector<8x512xf32>
    %cst_53 = arith.constant dense<0.000000e+00> : vector<32x512xf32>
    %113 = tpu.matmul %111, %112, %cst_53 {dimension_numbers = #tpu.dot_dimension_numbers<[1], [0], [0], [1], [0, 0, 1, 1], [], []>} : vector<32x8xf32>, vector<8x512xf32>, vector<32x512xf32> -> vector<32x512xf32>
    %114 = arith.mulf %92, %113 : vector<32x512xf32>
    %c0_54 = arith.constant 0 : index
    %c0_55 = arith.constant 0 : index
    %115 = vector.load %arg7[%c0_54, %c0_55] : memref<8x32xf32, #tpu.memory_space<vmem>>, vector<8x32xf32>
    %cst_56 = arith.constant dense<0.000000e+00> : vector<8x512xf32>
    %116 = tpu.matmul %115, %114, %cst_56 {dimension_numbers = #tpu.dot_dimension_numbers<[1], [0], [0], [1], [0, 0, 1, 1], [], []>} : vector<8x32xf32>, vector<32x512xf32>, vector<8x512xf32> -> vector<8x512xf32>
    %117 = vector.broadcast %4 : vector<8x1xf32> to vector<8x512xf32>
    %118 = arith.addf %116, %117 : vector<8x512xf32>
    %119 = arith.addf %118, %0 : vector<8x512xf32>
    %c0_57 = arith.constant 0 : index
    %c0_58 = arith.constant 0 : index
    %120 = vector.load %arg10[%c0_57, %c0_58] : memref<8x512xf32, #tpu.memory_space<vmem>>, vector<8x512xf32>
    tpu.vector_store %arg10[%c0_57, %c0_58], %119 {strides = array<i32>} : memref<8x512xf32, #tpu.memory_space<vmem>>, vector<8x512xf32>,
    return
  }
  func.func @transform_0(%arg0: i32) -> (i32, i32) {
    %c0_i32 = arith.constant 0 : i32
    %c0_i32_0 = arith.constant 0 : i32
    return %c0_i32, %arg0 : i32, i32
  }
  func.func @transform_1(%arg0: i32) -> (i32, i32) {
    %c0_i32 = arith.constant 0 : i32
    %c0_i32_0 = arith.constant 0 : i32
    %c0_i32_1 = arith.constant 0 : i32
    return %c0_i32, %c0_i32_0 : i32, i32
  }
  func.func @transform_2(%arg0: i32) -> (i32, i32) {
    %c0_i32 = arith.constant 0 : i32
    %c0_i32_0 = arith.constant 0 : i32
    %c0_i32_1 = arith.constant 0 : i32
    return %c0_i32, %c0_i32_0 : i32, i32
  }
  func.func @transform_3(%arg0: i32) -> (i32, i32) {
    %c0_i32 = arith.constant 0 : i32
    %c0_i32_0 = arith.constant 0 : i32
    %c0_i32_1 = arith.constant 0 : i32
    return %c0_i32, %c0_i32_0 : i32, i32
  }
  func.func @transform_4(%arg0: i32) -> (i32, i32) {
    %c0_i32 = arith.constant 0 : i32
    %c0_i32_0 = arith.constant 0 : i32
    %c0_i32_1 = arith.constant 0 : i32
    return %c0_i32, %c0_i32_0 : i32, i32
  }
  func.func @transform_5(%arg0: i32) -> (i32, i32) {
    %c0_i32 = arith.constant 0 : i32
    %c0_i32_0 = arith.constant 0 : i32
    %c0_i32_1 = arith.constant 0 : i32
    return %c0_i32, %c0_i32_0 : i32, i32
  }
  func.func @transform_6(%arg0: i32) -> (i32, i32) {
    %c0_i32 = arith.constant 0 : i32
    %c0_i32_0 = arith.constant 0 : i32
    %c0_i32_1 = arith.constant 0 : i32
    return %c0_i32, %c0_i32_0 : i32, i32
  }
  func.func @transform_7(%arg0: i32) -> (i32, i32) {
    %c0_i32 = arith.constant 0 : i32
    %c0_i32_0 = arith.constant 0 : i32
    %c0_i32_1 = arith.constant 0 : i32
    return %c0_i32, %c0_i32_0 : i32, i32
  }
  func.func @transform_8(%arg0: i32) -> (i32, i32) {
    %c0_i32 = arith.constant 0 : i32
    %c0_i32_0 = arith.constant 0 : i32
    %c0_i32_1 = arith.constant 0 : i32
    return %c0_i32, %c0_i32_0 : i32, i32
  }
  func.func @transform_9(%arg0: i32) -> (i32, i32) {
    %c0_i32 = arith.constant 0 : i32
    %c0_i32_0 = arith.constant 0 : i32
    return %c0_i32, %arg0 : i32, i32
  }
}

</mosaic_0001>

<llo_original>
// kernel: mbconv_forward.1
$region0: #{mbconv_forward.1}
  #allocation0 [shape = 'u32[]', space=smem, size = 0x4, offset = 0x4, fixed_abs, tag = 'smem constant byte address 0x4 - core index']
  #allocation1 [shape = 'u32[144,128]{1,0:T(1,128)}', space=vmem, size = 0x12000, scoped, tag = 'internal scratch']
  %s0 = inlined_call_operand.vmem [shape: f32[8,512], index: 0, kind: input, shape index: {}]
  %s1 = inlined_call_operand.vmem [shape: f32[32,8], index: 1, kind: input, shape index: {}]
  %s2 = inlined_call_operand.vmem [shape: f32[32,9], index: 2, kind: input, shape index: {}]
  %s3 = inlined_call_operand.vmem [shape: f32[9,512], index: 3, kind: input, shape index: {}]
  %s4 = inlined_call_operand.vmem [shape: f32[32,12], index: 4, kind: input, shape index: {}]
  %s5 = inlined_call_operand.vmem [shape: f32[8,33], index: 5, kind: input, shape index: {}]
  %s6 = inlined_call_operand.vmem [shape: f32[8,32], index: 6, kind: input, shape index: {}]
  %s7 = inlined_call_operand.vmem [shape: f32[512,8], index: 7, kind: input, shape index: {}]
  %s8 = inlined_call_operand.vmem [shape: f32[8,512], index: 8, kind: input, shape index: {}]
  %s9 = inlined_call_operand.vmem [shape: f32[8,512], index: 9, kind: output, shape index: {}]
  %s10 = sld [smem:[#allocation0]]
  $region46: #{mbconv_forward.1} parent=0
    _
  %s12 = ssub.s32 1, %s10
  %s13 = scalar_select 0, %s12, %s10
  // Predicated region
  $region2: #{mbconv_forward.1} parent=0 // pred_check
    _
  $region3: #{mbconv_forward.1} parent=0 // pred_check_branch
    %15 = sbr.rel (0) target = $region5
  $region4: #{mbconv_forward.1} parent=0 // pred_region
    _
  $region5: #{mbconv_forward.1} parent=0 // pred_fallthru
    _
  // Predicated region
  $region6: #{mbconv_forward.1} parent=0 // pred_check
    _
  $region7: #{mbconv_forward.1} parent=0 // pred_check_branch
    %17 = sbr.rel (0) target = $region9
  $region8: #{mbconv_forward.1} parent=0 // pred_region
    _
  $region9: #{mbconv_forward.1} parent=0 // pred_fallthru
    _
  // Predicated region
  $region10: #{mbconv_forward.1} parent=0 // pred_check
    _
  $region11: #{mbconv_forward.1} parent=0 // pred_check_branch
    %19 = sbr.rel (0) target = $region13
  $region12: #{mbconv_forward.1} parent=0 // pred_region
    _
  $region13: #{mbconv_forward.1} parent=0 // pred_fallthru
    _
  // Predicated region
  $region14: #{mbconv_forward.1} parent=0 // pred_check
    _
  $region15: #{mbconv_forward.1} parent=0 // pred_check_branch
    %21 = sbr.rel (0) target = $region17
  $region16: #{mbconv_forward.1} parent=0 // pred_region
    _
  $region17: #{mbconv_forward.1} parent=0 // pred_fallthru
    _
  // Predicated region
  $region18: #{mbconv_forward.1} parent=0 // pred_check
    _
  $region19: #{mbconv_forward.1} parent=0 // pred_check_branch
    %23 = sbr.rel (0) target = $region21
  $region20: #{mbconv_forward.1} parent=0 // pred_region
    _
  $region21: #{mbconv_forward.1} parent=0 // pred_fallthru
    _
  // Predicated region
  $region22: #{mbconv_forward.1} parent=0 // pred_check
    _
  $region23: #{mbconv_forward.1} parent=0 // pred_check_branch
    %25 = sbr.rel (0) target = $region25
  $region24: #{mbconv_forward.1} parent=0 // pred_region
    _
  $region25: #{mbconv_forward.1} parent=0 // pred_fallthru
    _
  // Predicated region
  $region26: #{mbconv_forward.1} parent=0 // pred_check
    _
  $region27: #{mbconv_forward.1} parent=0 // pred_check_branch
    %27 = sbr.rel (0) target = $region29
  $region28: #{mbconv_forward.1} parent=0 // pred_region
    _
  $region29: #{mbconv_forward.1} parent=0 // pred_fallthru
    _
  // Predicated region
  $region30: #{mbconv_forward.1} parent=0 // pred_check
    _
  $region31: #{mbconv_forward.1} parent=0 // pred_check_branch
    %29 = sbr.rel (0) target = $region33
  $region32: #{mbconv_forward.1} parent=0 // pred_region
    _
  $region33: #{mbconv_forward.1} parent=0 // pred_fallthru
    _
  // Predicated region
  $region34: #{mbconv_forward.1} parent=0 // pred_check
    _
  $region35: #{mbconv_forward.1} parent=0 // pred_check_branch
    %31 = sbr.rel (0) target = $region37
  $region36: #{mbconv_forward.1} parent=0 // pred_region
    _
  $region37: #{mbconv_forward.1} parent=0 // pred_fallthru
    _
  %v32 = vld [vmem:[%s0] sm:$0xff]
  %v33 = vld [vmem:[%s0 + $0x8] sm:$0xff]
  %v34 = vld [vmem:[%s0 + $0x10] sm:$0xff]
  %v35 = vld [vmem:[%s0 + $0x18] sm:$0xff]
  %v36 = vld [vmem:[%s4] sm:$0xff]
  %v37 = vld [vmem:[%s4 + $0x8] sm:$0xff]
  %v38 = vld [vmem:[%s4 + $0x10] sm:$0xff]
  %v39 = vld [vmem:[%s4 + $0x18] sm:$0xff]
  %v40 = vld [vmem:[%s5] sm:$0xff]
  %v41 = vld [vmem:[%s1] sm:$0xff]
  %v42 = vld [vmem:[%s1 + $0x8] sm:$0xff]
  %v43 = vld [vmem:[%s1 + $0x10] sm:$0xff]
  %v44 = vld [vmem:[%s1 + $0x18] sm:$0xff]
  %46 = vset.pattern.permute.xlu0 0
  %47 = vperm.xlu0 %46, %v36
  %v48 = vpop.permute.xlu0 %47
  %51 = vset.pattern.permute.xlu0 0
  %52 = vperm.xlu0 %51, %v37
  %v53 = vpop.permute.xlu0 %52
  %56 = vset.pattern.permute.xlu0 0
  %57 = vperm.xlu0 %56, %v38
  %v58 = vpop.permute.xlu0 %57
  %61 = vset.pattern.permute.xlu0 0
  %62 = vperm.xlu0 %61, %v39
  %v63 = vpop.permute.xlu0 %62
  %vm65 = vcmask 64512
  %v67 = vsel %vm65, %v41, 0
  %v70 = vsel %vm65, %v42, 0
  %v73 = vsel %vm65, %v43, 0
  %v76 = vsel %vm65, %v44, 0
  %78 = vmatprep.subr.mxu0 0.0
  %79 = vmatpush1.msra.mxu0 0.0
  %80 = vmatprep.subr.mxu0 0.0
  %81 = vmatpush1.msra.mxu0 0.0
  %82 = vmatprep.subr.mxu0 0.0
  %83 = vmatpush1.msra.mxu0 0.0
  %84 = vmatprep.subr.mxu0 0.0
  %85 = vmatpush1.msra.mxu0 0.0
  %86 = vmatprep.subr.mxu0 0.0
  %87 = vmatpush1.msra.mxu0 0.0
  %88 = vmatprep.subr.mxu0 0.0
  %89 = vmatpush1.msra.mxu0 0.0
  %90 = vmatprep.subr.mxu0 0.0
  %91 = vmatpush1.msra.mxu0 0.0
  %92 = vmatprep.subr.mxu0 0.0
  %93 = vmatpush1.msra.mxu0 0.0
  %94 = vmatprep.subr.mxu0 0.0
  %95 = vmatpush1.msra.mxu0 0.0
  %96 = vmatprep.subr.mxu0 0.0
  %97 = vmatpush1.msra.mxu0 0.0
  %98 = vmatprep.subr.mxu0 0.0
  %99 = vmatpush1.msra.mxu0 0.0
  %100 = vmatprep.subr.mxu0 0.0
  %101 = vmatpush1.msra.mxu0 0.0
  %102 = vmatprep.subr.mxu0 0.0
  %103 = vmatpush1.msra.mxu0 0.0
  %104 = vmatprep.subr.mxu0 0.0
  %105 = vmatpush1.msra.mxu0 0.0
  %106 = vmatprep.subr.mxu0 0.0
  %107 = vmatpush1.msra.mxu0 0.0
  %108 = vmatprep.subr.mxu0 %v33
  %109 = vmatpush1.msra.mxu0 %v32
  %110 = vmatprep.subr.mxu0 0.0
  %111 = vmatpush2.msra.mxu0 0.0
  %112 = vmatprep.subr.mxu0 0.0
  %113 = vmatpush2.msra.mxu0 0.0
  %114 = vmatprep.subr.mxu0 0.0
  %115 = vmatpush2.msra.mxu0 0.0
  %116 = vmatprep.subr.mxu0 0.0
  %117 = vmatpush2.msra.mxu0 0.0
  %118 = vmatprep.subr.mxu0 0.0
  %119 = vmatpush2.msra.mxu0 0.0
  %120 = vmatprep.subr.mxu0 0.0
  %121 = vmatpush2.msra.mxu0 0.0
  %122 = vmatprep.subr.mxu0 0.0
  %123 = vmatpush2.msra.mxu0 0.0
  %124 = vmatprep.subr.mxu0 0.0
  %125 = vmatpush2.msra.mxu0 0.0
  %126 = vmatprep.subr.mxu0 0.0
  %127 = vmatpush2.msra.mxu0 0.0
  %128 = vmatprep.subr.mxu0 0.0
  %129 = vmatpush2.msra.mxu0 0.0
  %130 = vmatprep.subr.mxu0 0.0
  %131 = vmatpush2.msra.mxu0 0.0
  %132 = vmatprep.subr.mxu0 0.0
  %133 = vmatpush2.msra.mxu0 0.0
  %134 = vmatprep.subr.mxu0 0.0
  %135 = vmatpush2.msra.mxu0 0.0
  %136 = vmatprep.subr.mxu0 0.0
  %137 = vmatpush2.msra.mxu0 0.0
  %138 = vmatprep.subr.mxu0 0.0
  %139 = vmatpush2.msra.mxu0 0.0
  %140 = vmatprep.subr.mxu0 0.0
  %141 = vmatpush2.msra.mxu0 0.0
  %142 = vmatprep.mubr.f32.mxu0 0.0
  %143 = vmatmul.mubr.f32.gmra.mxu0 %v67
  %v144 = vpop.f32.mrf.mxu0
  %v145 = vadd.f32 %v48, %v144
  %v146 = vpop.f32.mrf.mxu0
  %v147 = vadd.f32 %v48, %v146
  %148 = vmatprep.mubr.f32.mxu0 0.0
  %149 = vmatmul.mubr.f32.gmra.mxu0 %v70
  %v150 = vpop.f32.mrf.mxu0
  %v151 = vadd.f32 %v53, %v150
  %v152 = vpop.f32.mrf.mxu0
  %v153 = vadd.f32 %v53, %v152
  %154 = vmatprep.mubr.f32.mxu0 0.0
  %155 = vmatmul.mubr.f32.gmra.mxu0 %v73
  %v156 = vpop.f32.mrf.mxu0
  %v157 = vadd.f32 %v58, %v156
  %v158 = vpop.f32.mrf.mxu0
  %v159 = vadd.f32 %v58, %v158
  %160 = vmatprep.mubr.f32.mxu0 0.0
  %161 = vmatmul.mubr.f32.gmra.mxu0 %v76
  %v162 = vpop.f32.mrf.mxu0
  %v163 = vadd.f32 %v63, %v162
  %v164 = vpop.f32.mrf.mxu0
  %v165 = vadd.f32 %v63, %v164
  %166 = vdwg.mxu0
  %167 = vmatprep.subr.mxu0 0.0
  %168 = vmatpush1.msra.mxu0 0.0
  %169 = vmatprep.subr.mxu0 0.0
  %170 = vmatpush1.msra.mxu0 0.0
  %171 = vmatprep.subr.mxu0 0.0
  %172 = vmatpush1.msra.mxu0 0.0
  %173 = vmatprep.subr.mxu0 0.0
  %174 = vmatpush1.msra.mxu0 0.0
  %175 = vmatprep.subr.mxu0 0.0
  %176 = vmatpush1.msra.mxu0 0.0
  %177 = vmatprep.subr.mxu0 0.0
  %178 = vmatpush1.msra.mxu0 0.0
  %179 = vmatprep.subr.mxu0 0.0
  %180 = vmatpush1.msra.mxu0 0.0
  %181 = vmatprep.subr.mxu0 0.0
  %182 = vmatpush1.msra.mxu0 0.0
  %183 = vmatprep.subr.mxu0 0.0
  %184 = vmatpush1.msra.mxu0 0.0
  %185 = vmatprep.subr.mxu0 0.0
  %186 = vmatpush1.msra.mxu0 0.0
  %187 = vmatprep.subr.mxu0 0.0
  %188 = vmatpush1.msra.mxu0 0.0
  %189 = vmatprep.subr.mxu0 0.0
  %190 = vmatpush1.msra.mxu0 0.0
  %191 = vmatprep.subr.mxu0 0.0
  %192 = vmatpush1.msra.mxu0 0.0
  %193 = vmatprep.subr.mxu0 0.0
  %194 = vmatpush1.msra.mxu0 0.0
  %195 = vmatprep.subr.mxu0 0.0
  %196 = vmatpush1.msra.mxu0 0.0
  %197 = vmatprep.subr.mxu0 %v35
  %198 = vmatpush1.msra.mxu0 %v34
  %199 = vmatprep.subr.mxu0 0.0
  %200 = vmatpush2.msra.mxu0 0.0
  %201 = vmatprep.subr.mxu0 0.0
  %202 = vmatpush2.msra.mxu0 0.0
  %203 = vmatprep.subr.mxu0 0.0
  %204 = vmatpush2.msra.mxu0 0.0
  %205 = vmatprep.subr.mxu0 0.0
  %206 = vmatpush2.msra.mxu0 0.0
  %207 = vmatprep.subr.mxu0 0.0
  %208 = vmatpush2.msra.mxu0 0.0
  %209 = vmatprep.subr.mxu0 0.0
  %210 = vmatpush2.msra.mxu0 0.0
  %211 = vmatprep.subr.mxu0 0.0
  %212 = vmatpush2.msra.mxu0 0.0
  %213 = vmatprep.subr.mxu0 0.0
  %214 = vmatpush2.msra.mxu0 0.0
  %215 = vmatprep.subr.mxu0 0.0
  %216 = vmatpush2.msra.mxu0 0.0
  %217 = vmatprep.subr.mxu0 0.0
  %218 = vmatpush2.msra.mxu0 0.0
  %219 = vmatprep.subr.mxu0 0.0
  %220 = vmatpush2.msra.mxu0 0.0
  %221 = vmatprep.subr.mxu0 0.0
  %222 = vmatpush2.msra.mxu0 0.0
  %223 = vmatprep.subr.mxu0 0.0
  %224 = vmatpush2.msra.mxu0 0.0
  %225 = vmatprep.subr.mxu0 0.0
  %226 = vmatpush2.msra.mxu0 0.0
  %227 = vmatprep.subr.mxu0 0.0
  %228 = vmatpush2.msra.mxu0 0.0
  %229 = vmatprep.subr.mxu0 0.0
  %230 = vmatpush2.msra.mxu0 0.0
  %231 = vmatprep.mubr.f32.mxu0 0.0
  %232 = vmatmul.mubr.f32.gmra.mxu0 %v67
  %v233 = vpop.f32.mrf.mxu0
  %v234 = vadd.f32 %v48, %v233
  %v235 = vpop.f32.mrf.mxu0
  %v236 = vadd.f32 %v48, %v235
  %237 = vmatprep.mubr.f32.mxu0 0.0
  %238 = vmatmul.mubr.f32.gmra.mxu0 %v70
  %v239 = vpop.f32.mrf.mxu0
  %v240 = vadd.f32 %v53, %v239
  %v241 = vpop.f32.mrf.mxu0
  %v242 = vadd.f32 %v53, %v241
  %243 = vmatprep.mubr.f32.mxu0 0.0
  %244 = vmatmul.mubr.f32.gmra.mxu0 %v73
  %v245 = vpop.f32.mrf.mxu0
  %v246 = vadd.f32 %v58, %v245
  %v247 = vpop.f32.mrf.mxu0
  %v248 = vadd.f32 %v58, %v247
  %249 = vmatprep.mubr.f32.mxu0 0.0
  %250 = vmatmul.mubr.f32.gmra.mxu0 %v76
  %v251 = vpop.f32.mrf.mxu0
  %v252 = vadd.f32 %v63, %v251
  %v253 = vpop.f32.mrf.mxu0
  %v254 = vadd.f32 %v63, %v253
  %255 = vdwg.mxu0
  %v256 = vxor.u32 %v145, 2147483648
  %v257 = vxor.u32 %v147, 2147483648
  %v258 = vxor.u32 %v234, 2147483648
  %v259 = vxor.u32 %v236, 2147483648
  %v260 = vxor.u32 %v151, 2147483648
  %v261 = vxor.u32 %v153, 2147483648
  %v262 = vxor.u32 %v240, 2147483648
  %v263 = vxor.u32 %v242, 2147483648
  %v264 = vxor.u32 %v157, 2147483648
  %v265 = vxor.u32 %v159, 2147483648
  %v266 = vxor.u32 %v246, 2147483648
  %v267 = vxor.u32 %v248, 2147483648
  %v268 = vxor.u32 %v163, 2147483648
  %v269 = vxor.u32 %v165, 2147483648
  %v270 = vxor.u32 %v252, 2147483648
  %v271 = vxor.u32 %v254, 2147483648
  %v272 = vmul.f32 %v256, 1.442695
  %v273 = vpow.pop %v272
  %v274 = vmul.f32 %v257, 1.442695
  %v275 = vpow.pop %v274
  %v276 = vmul.f32 %v258, 1.442695
  %v277 = vpow.pop %v276
  %v278 = vmul.f32 %v259, 1.442695
  %v279 = vpow.pop %v278
  %v280 = vmul.f32 %v260, 1.442695
  %v281 = vpow.pop %v280
  %v282 = vmul.f32 %v261, 1.442695
  %v283 = vpow.pop %v282
  %v284 = vmul.f32 %v262, 1.442695
  %v285 = vpow.pop %v284
  %v286 = vmul.f32 %v263, 1.442695
  %v287 = vpow.pop %v286
  %v288 = vmul.f32 %v264, 1.442695
  %v289 = vpow.pop %v288
  %v290 = vmul.f32 %v265, 1.442695
  %v291 = vpow.pop %v290
  %v292 = vmul.f32 %v266, 1.442695
  %v293 = vpow.pop %v292
  %v294 = vmul.f32 %v267, 1.442695
  %v295 = vpow.pop %v294
  %v296 = vmul.f32 %v268, 1.442695
  %v297 = vpow.pop %v296
  %v298 = vmul.f32 %v269, 1.442695
  %v299 = vpow.pop %v298
  %v300 = vmul.f32 %v270, 1.442695
  %v301 = vpow.pop %v300
  %v302 = vmul.f32 %v271, 1.442695
  %v303 = vpow.pop %v302
  %v304 = vadd.f32 %v273, 1.0
  %v305 = vadd.f32 %v275, 1.0
  %v306 = vadd.f32 %v277, 1.0
  %v307 = vadd.f32 %v279, 1.0
  %v308 = vadd.f32 %v281, 1.0
  %v309 = vadd.f32 %v283, 1.0
  %v310 = vadd.f32 %v285, 1.0
  %v311 = vadd.f32 %v287, 1.0
  %v312 = vadd.f32 %v289, 1.0
  %v313 = vadd.f32 %v291, 1.0
  %v314 = vadd.f32 %v293, 1.0
  %v315 = vadd.f32 %v295, 1.0
  %v316 = vadd.f32 %v297, 1.0
  %v317 = vadd.f32 %v299, 1.0
  %v318 = vadd.f32 %v301, 1.0
  %v319 = vadd.f32 %v303, 1.0
  %v320 = vrcp.pop %v304
  %v321 = vmul.f32 1.0, %v320
  %v322 = vrcp.pop %v305
  %v323 = vmul.f32 1.0, %v322
  %v324 = vrcp.pop %v306
  %v325 = vmul.f32 1.0, %v324
  %v326 = vrcp.pop %v307
  %v327 = vmul.f32 1.0, %v326
  %v328 = vrcp.pop %v308
  %v329 = vmul.f32 1.0, %v328
  %v330 = vrcp.pop %v309
  %v331 = vmul.f32 1.0, %v330
  %v332 = vrcp.pop %v310
  %v333 = vmul.f32 1.0, %v332
  %v334 = vrcp.pop %v311
  %v335 = vmul.f32 1.0, %v334
  %v336 = vrcp.pop %v312
  %v337 = vmul.f32 1.0, %v336
  %v338 = vrcp.pop %v313
  %v339 = vmul.f32 1.0, %v338
  %v340 = vrcp.pop %v314
  %v341 = vmul.f32 1.0, %v340
  %v342 = vrcp.pop %v315
  %v343 = vmul.f32 1.0, %v342
  %v344 = vrcp.pop %v316
  %v345 = vmul.f32 1.0, %v344
  %v346 = vrcp.pop %v317
  %v347 = vmul.f32 1.0, %v346
  %v348 = vrcp.pop %v318
  %v349 = vmul.f32 1.0, %v348
  %v350 = vrcp.pop %v319
  %v351 = vmul.f32 1.0, %v350
  %v352 = vmul.f32 %v145, %v321
  %v353 = vmul.f32 %v147, %v323
  %v354 = vmul.f32 %v234, %v325
  %v355 = vmul.f32 %v236, %v327
  %v356 = vmul.f32 %v151, %v329
  %v357 = vmul.f32 %v153, %v331
  %v358 = vmul.f32 %v240, %v333
  %v359 = vmul.f32 %v242, %v335
  %v360 = vmul.f32 %v157, %v337
  %v361 = vmul.f32 %v159, %v339
  %v362 = vmul.f32 %v246, %v341
  %v363 = vmul.f32 %v248, %v343
  %v364 = vmul.f32 %v163, %v345
  %v365 = vmul.f32 %v165, %v347
  %v366 = vmul.f32 %v252, %v349
  %v367 = vmul.f32 %v254, %v351
  %v368 = vld [vmem:[%s2] sm:$0xff]
  %v369 = vld [vmem:[%s2 + $0x8] sm:$0xff]
  %v370 = vld [vmem:[%s2 + $0x10] sm:$0xff]
  %v371 = vld [vmem:[%s2 + $0x18] sm:$0xff]
  %373 = vset.pattern.permute.xlu0 4
  %374 = vperm.xlu0 %373, %v368
  %v375 = vpop.permute.xlu0 %374
  %378 = vset.pattern.permute.xlu0 4
  %379 = vperm.xlu0 %378, %v369
  %v380 = vpop.permute.xlu0 %379
  %383 = vset.pattern.permute.xlu0 4
  %384 = vperm.xlu0 %383, %v370
  %v385 = vpop.permute.xlu0 %384
  %388 = vset.pattern.permute.xlu0 4
  %389 = vperm.xlu0 %388, %v371
  %v390 = vpop.permute.xlu0 %389
  %v392 = vmul.f32 %v352, %v375
  %v393 = vmul.f32 %v353, %v375
  %v394 = vmul.f32 %v354, %v375
  %v395 = vmul.f32 %v355, %v375
  %v396 = vmul.f32 %v356, %v380
  %v397 = vmul.f32 %v357, %v380
  %v398 = vmul.f32 %v358, %v380
  %v399 = vmul.f32 %v359, %v380
  %v400 = vmul.f32 %v360, %v385
  %v401 = vmul.f32 %v361, %v385
  %v402 = vmul.f32 %v362, %v385
  %v403 = vmul.f32 %v363, %v385
  %v404 = vmul.f32 %v364, %v390
  %v405 = vmul.f32 %v365, %v390
  %v406 = vmul.f32 %v366, %v390
  %v407 = vmul.f32 %v367, %v390
  %408 = vrot.lane.b32.xlu0 %v352, 17
  %v409 = vpop.permute.xlu0 %408
  %410 = vrot.lane.b32.xlu0 %v356, 17
  %v411 = vpop.permute.xlu0 %410
  %412 = vrot.lane.b32.xlu0 %v360, 17
  %v413 = vpop.permute.xlu0 %412
  %414 = vrot.lane.b32.xlu0 %v364, 17
  %v415 = vpop.permute.xlu0 %414
  %416 = vrot.lane.b32.xlu0 %v353, 17
  %v417 = vpop.permute.xlu0 %416
  %418 = vrot.lane.b32.xlu0 %v357, 17
  %v419 = vpop.permute.xlu0 %418
  %420 = vrot.lane.b32.xlu0 %v361, 17
  %v421 = vpop.permute.xlu0 %420
  %422 = vrot.lane.b32.xlu0 %v365, 17
  %v423 = vpop.permute.xlu0 %422
  %424 = vrot.lane.b32.xlu0 %v354, 17
  %v425 = vpop.permute.xlu0 %424
  %426 = vrot.lane.b32.xlu0 %v358, 17
  %v427 = vpop.permute.xlu0 %426
  %428 = vrot.lane.b32.xlu0 %v362, 17
  %v429 = vpop.permute.xlu0 %428
  %430 = vrot.lane.b32.xlu0 %v366, 17
  %v431 = vpop.permute.xlu0 %430
  %432 = vrot.lane.b32.xlu0 %v355, 17
  %v433 = vpop.permute.xlu0 %432
  %434 = vrot.lane.b32.xlu0 %v359, 17
  %v435 = vpop.permute.xlu0 %434
  %436 = vrot.lane.b32.xlu0 %v363, 17
  %v437 = vpop.permute.xlu0 %436
  %438 = vrot.lane.b32.xlu0 %v367, 17
  %v439 = vpop.permute.xlu0 %438
  %v440 = vlaneseq
  %v441 = vand.u32 %v440, 127
  %vm442 = vcmp.lt.s32.totalorder %v441, 17
  %v443 = vsel %vm442, %v425, %v433
  %v444 = vsel %vm442, %v427, %v435
  %v445 = vsel %vm442, %v429, %v437
  %v446 = vsel %vm442, %v431, %v439
  %v447 = vsel %vm442, %v417, %v425
  %v448 = vsel %vm442, %v419, %v427
  %v449 = vsel %vm442, %v421, %v429
  %v450 = vsel %vm442, %v423, %v431
  %v451 = vsel %vm442, %v409, %v417
  %v452 = vsel %vm442, %v411, %v419
  %v453 = vsel %vm442, %v413, %v421
  %v454 = vsel %vm442, %v415, %v423
  %v455 = vsel %vm442, %v433, %v409
  %v456 = vsel %vm442, %v435, %v411
  %v457 = vsel %vm442, %v437, %v413
  %v458 = vsel %vm442, %v439, %v415
  %v459 = vld [vmem:[%s3] ss:$8 sm:$0xf]
  %v461 = vlaneseq
  %v462 = vshrl.u32 %v461, 7
  %v463 = vsub.s32 0, %v462
  %v464 = vrot.slane %v459, %v463
  %v465 = vlaneseq
  %v466 = vshrl.u32 %v465, 7
  %v467 = vsub.s32 1, %v466
  %v468 = vrot.slane %v459, %v467
  %v469 = vlaneseq
  %v470 = vshrl.u32 %v469, 7
  %v471 = vsub.s32 2, %v470
  %v472 = vrot.slane %v459, %v471
  %v473 = vlaneseq
  %v474 = vshrl.u32 %v473, 7
  %v475 = vsub.s32 3, %v474
  %v476 = vrot.slane %v459, %v475
  %v481 = vmul.f32 %v455, %v464
  %v482 = vmul.f32 %v451, %v468
  %v483 = vmul.f32 %v447, %v472
  %v484 = vmul.f32 %v443, %v476
  %v485 = vmul.f32 %v456, %v464
  %v486 = vmul.f32 %v452, %v468
  %v487 = vmul.f32 %v448, %v472
  %v488 = vmul.f32 %v444, %v476
  %v489 = vmul.f32 %v457, %v464
  %v490 = vmul.f32 %v453, %v468
  %v491 = vmul.f32 %v449, %v472
  %v492 = vmul.f32 %v445, %v476
  %v493 = vmul.f32 %v458, %v464
  %v494 = vmul.f32 %v454, %v468
  %v495 = vmul.f32 %v450, %v472
  %v496 = vmul.f32 %v446, %v476
  %497 = vset.pattern.permute.xlu0 0
  %498 = vperm.xlu0 %497, %v368
  %v499 = vpop.permute.xlu0 %498
  %501 = vset.pattern.permute.xlu0 0
  %502 = vperm.xlu0 %501, %v369
  %v503 = vpop.permute.xlu0 %502
  %505 = vset.pattern.permute.xlu0 0
  %506 = vperm.xlu0 %505, %v370
  %v507 = vpop.permute.xlu0 %506
  %509 = vset.pattern.permute.xlu0 0
  %510 = vperm.xlu0 %509, %v371
  %v511 = vpop.permute.xlu0 %510
  %v513 = vmul.f32 %v481, %v499
  %v514 = vmul.f32 %v482, %v499
  %v515 = vmul.f32 %v483, %v499
  %v516 = vmul.f32 %v484, %v499
  %v517 = vmul.f32 %v485, %v503
  %v518 = vmul.f32 %v486, %v503
  %v519 = vmul.f32 %v487, %v503
  %v520 = vmul.f32 %v488, %v503
  %v521 = vmul.f32 %v489, %v507
  %v522 = vmul.f32 %v490, %v507
  %v523 = vmul.f32 %v491, %v507
  %v524 = vmul.f32 %v492, %v507
  %v525 = vmul.f32 %v493, %v511
  %v526 = vmul.f32 %v494, %v511
  %v527 = vmul.f32 %v495, %v511
  %v528 = vmul.f32 %v496, %v511
  %v529 = vadd.f32 %v392, %v513
  %v530 = vadd.f32 %v393, %v514
  %v531 = vadd.f32 %v394, %v515
  %v532 = vadd.f32 %v395, %v516
  %v533 = vadd.f32 %v396, %v517
  %v534 = vadd.f32 %v397, %v518
  %v535 = vadd.f32 %v398, %v519
  %v536 = vadd.f32 %v399, %v520
  %v537 = vadd.f32 %v400, %v521
  %v538 = vadd.f32 %v401, %v522
  %v539 = vadd.f32 %v402, %v523
  %v540 = vadd.f32 %v403, %v524
  %v541 = vadd.f32 %v404, %v525
  %v542 = vadd.f32 %v405, %v526
  %v543 = vadd.f32 %v406, %v527
  %v544 = vadd.f32 %v407, %v528
  %545 = vrot.lane.b32.xlu0 %v352, 16
  %v546 = vpop.permute.xlu0 %545
  %547 = vrot.lane.b32.xlu0 %v356, 16
  %v548 = vpop.permute.xlu0 %547
  %549 = vrot.lane.b32.xlu0 %v360, 16
  %v550 = vpop.permute.xlu0 %549
  %551 = vrot.lane.b32.xlu0 %v364, 16
  %v552 = vpop.permute.xlu0 %551
  %553 = vrot.lane.b32.xlu0 %v353, 16
  %v554 = vpop.permute.xlu0 %553
  %555 = vrot.lane.b32.xlu0 %v357, 16
  %v556 = vpop.permute.xlu0 %555
  %557 = vrot.lane.b32.xlu0 %v361, 16
  %v558 = vpop.permute.xlu0 %557
  %559 = vrot.lane.b32.xlu0 %v365, 16
  %v560 = vpop.permute.xlu0 %559
  %561 = vrot.lane.b32.xlu0 %v354, 16
  %v562 = vpop.permute.xlu0 %561
  %563 = vrot.lane.b32.xlu0 %v358, 16
  %v564 = vpop.permute.xlu0 %563
  %565 = vrot.lane.b32.xlu0 %v362, 16
  %v566 = vpop.permute.xlu0 %565
  %567 = vrot.lane.b32.xlu0 %v366, 16
  %v568 = vpop.permute.xlu0 %567
  %569 = vrot.lane.b32.xlu0 %v355, 16
  %v570 = vpop.permute.xlu0 %569
  %571 = vrot.lane.b32.xlu0 %v359, 16
  %v572 = vpop.permute.xlu0 %571
  %573 = vrot.lane.b32.xlu0 %v363, 16
  %v574 = vpop.permute.xlu0 %573
  %575 = vrot.lane.b32.xlu0 %v367, 16
  %v576 = vpop.permute.xlu0 %575
  %vm577 = vcmp.lt.s32.totalorder %v441, 16
  %v578 = vsel %vm577, %v562, %v570
  %v579 = vsel %vm577, %v564, %v572
  %v580 = vsel %vm577, %v566, %v574
  %v581 = vsel %vm577, %v568, %v576
  %v582 = vsel %vm577, %v554, %v562
  %v583 = vsel %vm577, %v556, %v564
  %v584 = vsel %vm577, %v558, %v566
  %v585 = vsel %vm577, %v560, %v568
  %v586 = vsel %vm577, %v546, %v554
  %v587 = vsel %vm577, %v548, %v556
  %v588 = vsel %vm577, %v550, %v558
  %v589 = vsel %vm577, %v552, %v560
  %v590 = vsel %vm577, %v570, %v546
  %v591 = vsel %vm577, %v572, %v548
  %v592 = vsel %vm577, %v574, %v550
  %v593 = vsel %vm577, %v576, %v552
  %s594 = scalar_lea.vmem %s3, 1
  %v595 = vld [vmem:[%s594] ss:$8 sm:$0xf]
  %v597 = vlaneseq
  %v598 = vshrl.u32 %v597, 7
  %v599 = vsub.s32 0, %v598
  %v600 = vrot.slane %v595, %v599
  %v601 = vlaneseq
  %v602 = vshrl.u32 %v601, 7
  %v603 = vsub.s32 1, %v602
  %v604 = vrot.slane %v595, %v603
  %v605 = vlaneseq
  %v606 = vshrl.u32 %v605, 7
  %v607 = vsub.s32 2, %v606
  %v608 = vrot.slane %v595, %v607
  %v609 = vlaneseq
  %v610 = vshrl.u32 %v609, 7
  %v611 = vsub.s32 3, %v610
  %v612 = vrot.slane %v595, %v611
  %v617 = vmul.f32 %v590, %v600
  %v618 = vmul.f32 %v586, %v604
  %v619 = vmul.f32 %v582, %v608
  %v620 = vmul.f32 %v578, %v612
  %v621 = vmul.f32 %v591, %v600
  %v622 = vmul.f32 %v587, %v604
  %v623 = vmul.f32 %v583, %v608
  %v624 = vmul.f32 %v579, %v612
  %v625 = vmul.f32 %v592, %v600
  %v626 = vmul.f32 %v588, %v604
  %v627 = vmul.f32 %v584, %v608
  %v628 = vmul.f32 %v580, %v612
  %v629 = vmul.f32 %v593, %v600
  %v630 = vmul.f32 %v589, %v604
  %v631 = vmul.f32 %v585, %v608
  %v632 = vmul.f32 %v581, %v612
  %633 = vset.pattern.permute.xlu0 1
  %634 = vperm.xlu0 %633, %v368
  %v635 = vpop.permute.xlu0 %634
  %637 = vset.pattern.permute.xlu0 1
  %638 = vperm.xlu0 %637, %v369
  %v639 = vpop.permute.xlu0 %638
  %641 = vset.pattern.permute.xlu0 1
  %642 = vperm.xlu0 %641, %v370
  %v643 = vpop.permute.xlu0 %642
  %645 = vset.pattern.permute.xlu0 1
  %646 = vperm.xlu0 %645, %v371
  %v647 = vpop.permute.xlu0 %646
  %v649 = vmul.f32 %v617, %v635
  %v650 = vmul.f32 %v618, %v635
  %v651 = vmul.f32 %v619, %v635
  %v652 = vmul.f32 %v620, %v635
  %v653 = vmul.f32 %v621, %v639
  %v654 = vmul.f32 %v622, %v639
  %v655 = vmul.f32 %v623, %v639
  %v656 = vmul.f32 %v624, %v639
  %v657 = vmul.f32 %v625, %v643
  %v658 = vmul.f32 %v626, %v643
  %v659 = vmul.f32 %v627, %v643
  %v660 = vmul.f32 %v628, %v643
  %v661 = vmul.f32 %v629, %v647
  %v662 = vmul.f32 %v630, %v647
  %v663 = vmul.f32 %v631, %v647
  %v664 = vmul.f32 %v632, %v647
  %v665 = vadd.f32 %v529, %v649
  %v666 = vadd.f32 %v530, %v650
  %v667 = vadd.f32 %v531, %v651
  %v668 = vadd.f32 %v532, %v652
  %v669 = vadd.f32 %v533, %v653
  %v670 = vadd.f32 %v534, %v654
  %v671 = vadd.f32 %v535, %v655
  %v672 = vadd.f32 %v536, %v656
  %v673 = vadd.f32 %v537, %v657
  %v674 = vadd.f32 %v538, %v658
  %v675 = vadd.f32 %v539, %v659
  %v676 = vadd.f32 %v540, %v660
  %v677 = vadd.f32 %v541, %v661
  %v678 = vadd.f32 %v542, %v662
  %v679 = vadd.f32 %v543, %v663
  %v680 = vadd.f32 %v544, %v664
  %681 = vrot.lane.b32.xlu0 %v352, 15
  %v682 = vpop.permute.xlu0 %681
  %683 = vrot.lane.b32.xlu0 %v356, 15
  %v684 = vpop.permute.xlu0 %683
  %685 = vrot.lane.b32.xlu0 %v360, 15
  %v686 = vpop.permute.xlu0 %685
  %687 = vrot.lane.b32.xlu0 %v364, 15
  %v688 = vpop.permute.xlu0 %687
  %689 = vrot.lane.b32.xlu0 %v353, 15
  %v690 = vpop.permute.xlu0 %689
  %691 = vrot.lane.b32.xlu0 %v357, 15
  %v692 = vpop.permute.xlu0 %691
  %693 = vrot.lane.b32.xlu0 %v361, 15
  %v694 = vpop.permute.xlu0 %693
  %695 = vrot.lane.b32.xlu0 %v365, 15
  %v696 = vpop.permute.xlu0 %695
  %697 = vrot.lane.b32.xlu0 %v354, 15
  %v698 = vpop.permute.xlu0 %697
  %699 = vrot.lane.b32.xlu0 %v358, 15
  %v700 = vpop.permute.xlu0 %699
  %701 = vrot.lane.b32.xlu0 %v362, 15
  %v702 = vpop.permute.xlu0 %701
  %703 = vrot.lane.b32.xlu0 %v366, 15
  %v704 = vpop.permute.xlu0 %703
  %705 = vrot.lane.b32.xlu0 %v355, 15
  %v706 = vpop.permute.xlu0 %705
  %707 = vrot.lane.b32.xlu0 %v359, 15
  %v708 = vpop.permute.xlu0 %707
  %709 = vrot.lane.b32.xlu0 %v363, 15
  %v710 = vpop.permute.xlu0 %709
  %711 = vrot.lane.b32.xlu0 %v367, 15
  %v712 = vpop.permute.xlu0 %711
  %vm713 = vcmp.lt.s32.totalorder %v441, 15
  %v714 = vsel %vm713, %v698, %v706
  %v715 = vsel %vm713, %v700, %v708
  %v716 = vsel %vm713, %v702, %v710
  %v717 = vsel %vm713, %v704, %v712
  %v718 = vsel %vm713, %v690, %v698
  %v719 = vsel %vm713, %v692, %v700
  %v720 = vsel %vm713, %v694, %v702
  %v721 = vsel %vm713, %v696, %v704
  %v722 = vsel %vm713, %v682, %v690
  %v723 = vsel %vm713, %v684, %v692
  %v724 = vsel %vm713, %v686, %v694
  %v725 = vsel %vm713, %v688, %v696
  %v726 = vsel %vm713, %v706, %v682
  %v727 = vsel %vm713, %v708, %v684
  %v728 = vsel %vm713, %v710, %v686
  %v729 = vsel %vm713, %v712, %v688
  %s730 = scalar_lea.vmem %s3, 2
  %v731 = vld [vmem:[%s730] ss:$8 sm:$0xf]
  %v733 = vlaneseq
  %v734 = vshrl.u32 %v733, 7
  %v735 = vsub.s32 0, %v734
  %v736 = vrot.slane %v731, %v735
  %v737 = vlaneseq
  %v738 = vshrl.u32 %v737, 7
  %v739 = vsub.s32 1, %v738
  %v740 = vrot.slane %v731, %v739
  %v741 = vlaneseq
  %v742 = vshrl.u32 %v741, 7
  %v743 = vsub.s32 2, %v742
  %v744 = vrot.slane %v731, %v743
  %v745 = vlaneseq
  %v746 = vshrl.u32 %v745, 7
  %v747 = vsub.s32 3, %v746
  %v748 = vrot.slane %v731, %v747
  %v753 = vmul.f32 %v726, %v736
  %v754 = vmul.f32 %v722, %v740
  %v755 = vmul.f32 %v718, %v744
  %v756 = vmul.f32 %v714, %v748
  %v757 = vmul.f32 %v727, %v736
  %v758 = vmul.f32 %v723, %v740
  %v759 = vmul.f32 %v719, %v744
  %v760 = vmul.f32 %v715, %v748
  %v761 = vmul.f32 %v728, %v736
  %v762 = vmul.f32 %v724, %v740
  %v763 = vmul.f32 %v720, %v744
  %v764 = vmul.f32 %v716, %v748
  %v765 = vmul.f32 %v729, %v736
  %v766 = vmul.f32 %v725, %v740
  %v767 = vmul.f32 %v721, %v744
  %v768 = vmul.f32 %v717, %v748
  %769 = vset.pattern.permute.xlu0 2
  %770 = vperm.xlu0 %769, %v368
  %v771 = vpop.permute.xlu0 %770
  %773 = vset.pattern.permute.xlu0 2
  %774 = vperm.xlu0 %773, %v369
  %v775 = vpop.permute.xlu0 %774
  %777 = vset.pattern.permute.xlu0 2
  %778 = vperm.xlu0 %777, %v370
  %v779 = vpop.permute.xlu0 %778
  %781 = vset.pattern.permute.xlu0 2
  %782 = vperm.xlu0 %781, %v371
  %v783 = vpop.permute.xlu0 %782
  %v785 = vmul.f32 %v753, %v771
  %v786 = vmul.f32 %v754, %v771
  %v787 = vmul.f32 %v755, %v771
  %v788 = vmul.f32 %v756, %v771
  %v789 = vmul.f32 %v757, %v775
  %v790 = vmul.f32 %v758, %v775
  %v791 = vmul.f32 %v759, %v775
  %v792 = vmul.f32 %v760, %v775
  %v793 = vmul.f32 %v761, %v779
  %v794 = vmul.f32 %v762, %v779
  %v795 = vmul.f32 %v763, %v779
  %v796 = vmul.f32 %v764, %v779
  %v797 = vmul.f32 %v765, %v783
  %v798 = vmul.f32 %v766, %v783
  %v799 = vmul.f32 %v767, %v783
  %v800 = vmul.f32 %v768, %v783
  %v801 = vadd.f32 %v665, %v785
  %v802 = vadd.f32 %v666, %v786
  %v803 = vadd.f32 %v667, %v787
  %v804 = vadd.f32 %v668, %v788
  %v805 = vadd.f32 %v669, %v789
  %v806 = vadd.f32 %v670, %v790
  %v807 = vadd.f32 %v671, %v791
  %v808 = vadd.f32 %v672, %v792
  %v809 = vadd.f32 %v673, %v793
  %v810 = vadd.f32 %v674, %v794
  %v811 = vadd.f32 %v675, %v795
  %v812 = vadd.f32 %v676, %v796
  %v813 = vadd.f32 %v677, %v797
  %v814 = vadd.f32 %v678, %v798
  %v815 = vadd.f32 %v679, %v799
  %v816 = vadd.f32 %v680, %v800
  %817 = vrot.lane.b32.xlu0 %v352, 1
  %v818 = vpop.permute.xlu0 %817
  %819 = vrot.lane.b32.xlu0 %v356, 1
  %v820 = vpop.permute.xlu0 %819
  %821 = vrot.lane.b32.xlu0 %v360, 1
  %v822 = vpop.permute.xlu0 %821
  %823 = vrot.lane.b32.xlu0 %v364, 1
  %v824 = vpop.permute.xlu0 %823
  %825 = vrot.lane.b32.xlu0 %v353, 1
  %v826 = vpop.permute.xlu0 %825
  %827 = vrot.lane.b32.xlu0 %v357, 1
  %v828 = vpop.permute.xlu0 %827
  %829 = vrot.lane.b32.xlu0 %v361, 1
  %v830 = vpop.permute.xlu0 %829
  %831 = vrot.lane.b32.xlu0 %v365, 1
  %v832 = vpop.permute.xlu0 %831
  %833 = vrot.lane.b32.xlu0 %v354, 1
  %v834 = vpop.permute.xlu0 %833
  %835 = vrot.lane.b32.xlu0 %v358, 1
  %v836 = vpop.permute.xlu0 %835
  %837 = vrot.lane.b32.xlu0 %v362, 1
  %v838 = vpop.permute.xlu0 %837
  %839 = vrot.lane.b32.xlu0 %v366, 1
  %v840 = vpop.permute.xlu0 %839
  %841 = vrot.lane.b32.xlu0 %v355, 1
  %v842 = vpop.permute.xlu0 %841
  %843 = vrot.lane.b32.xlu0 %v359, 1
  %v844 = vpop.permute.xlu0 %843
  %845 = vrot.lane.b32.xlu0 %v363, 1
  %v846 = vpop.permute.xlu0 %845
  %847 = vrot.lane.b32.xlu0 %v367, 1
  %v848 = vpop.permute.xlu0 %847
  %vm849 = vcmp.lt.s32.totalorder %v441, 1
  %v850 = vsel %vm849, %v834, %v842
  %v851 = vsel %vm849, %v836, %v844
  %v852 = vsel %vm849, %v838, %v846
  %v853 = vsel %vm849, %v840, %v848
  %v854 = vsel %vm849, %v826, %v834
  %v855 = vsel %vm849, %v828, %v836
  %v856 = vsel %vm849, %v830, %v838
  %v857 = vsel %vm849, %v832, %v840
  %v858 = vsel %vm849, %v818, %v826
  %v859 = vsel %vm849, %v820, %v828
  %v860 = vsel %vm849, %v822, %v830
  %v861 = vsel %vm849, %v824, %v832
  %v862 = vsel %vm849, %v842, %v818
  %v863 = vsel %vm849, %v844, %v820
  %v864 = vsel %vm849, %v846, %v822
  %v865 = vsel %vm849, %v848, %v824
  %s866 = scalar_lea.vmem %s3, 3
  %v867 = vld [vmem:[%s866] ss:$8 sm:$0xf]
  %v869 = vlaneseq
  %v870 = vshrl.u32 %v869, 7
  %v871 = vsub.s32 0, %v870
  %v872 = vrot.slane %v867, %v871
  %v873 = vlaneseq
  %v874 = vshrl.u32 %v873, 7
  %v875 = vsub.s32 1, %v874
  %v876 = vrot.slane %v867, %v875
  %v877 = vlaneseq
  %v878 = vshrl.u32 %v877, 7
  %v879 = vsub.s32 2, %v878
  %v880 = vrot.slane %v867, %v879
  %v881 = vlaneseq
  %v882 = vshrl.u32 %v881, 7
  %v883 = vsub.s32 3, %v882
  %v884 = vrot.slane %v867, %v883
  %v889 = vmul.f32 %v862, %v872
  %v890 = vmul.f32 %v858, %v876
  %v891 = vmul.f32 %v854, %v880
  %v892 = vmul.f32 %v850, %v884
  %v893 = vmul.f32 %v863, %v872
  %v894 = vmul.f32 %v859, %v876
  %v895 = vmul.f32 %v855, %v880
  %v896 = vmul.f32 %v851, %v884
  %v897 = vmul.f32 %v864, %v872
  %v898 = vmul.f32 %v860, %v876
  %v899 = vmul.f32 %v856, %v880
  %v900 = vmul.f32 %v852, %v884
  %v901 = vmul.f32 %v865, %v872
  %v902 = vmul.f32 %v861, %v876
  %v903 = vmul.f32 %v857, %v880
  %v904 = vmul.f32 %v853, %v884
  %905 = vset.pattern.permute.xlu0 3
  %906 = vperm.xlu0 %905, %v368
  %v907 = vpop.permute.xlu0 %906
  %909 = vset.pattern.permute.xlu0 3
  %910 = vperm.xlu0 %909, %v369
  %v911 = vpop.permute.xlu0 %910
  %913 = vset.pattern.permute.xlu0 3
  %914 = vperm.xlu0 %913, %v370
  %v915 = vpop.permute.xlu0 %914
  %917 = vset.pattern.permute.xlu0 3
  %918 = vperm.xlu0 %917, %v371
  %v919 = vpop.permute.xlu0 %918
  %v921 = vmul.f32 %v889, %v907
  %v922 = vmul.f32 %v890, %v907
  %v923 = vmul.f32 %v891, %v907
  %v924 = vmul.f32 %v892, %v907
  %v925 = vmul.f32 %v893, %v911
  %v926 = vmul.f32 %v894, %v911
  %v927 = vmul.f32 %v895, %v911
  %v928 = vmul.f32 %v896, %v911
  %v929 = vmul.f32 %v897, %v915
  %v930 = vmul.f32 %v898, %v915
  %v931 = vmul.f32 %v899, %v915
  %v932 = vmul.f32 %v900, %v915
  %v933 = vmul.f32 %v901, %v919
  %v934 = vmul.f32 %v902, %v919
  %v935 = vmul.f32 %v903, %v919
  %v936 = vmul.f32 %v904, %v919
  %v937 = vadd.f32 %v801, %v921
  %v938 = vadd.f32 %v802, %v922
  %v939 = vadd.f32 %v803, %v923
  %v940 = vadd.f32 %v804, %v924
  %v941 = vadd.f32 %v805, %v925
  %v942 = vadd.f32 %v806, %v926
  %v943 = vadd.f32 %v807, %v927
  %v944 = vadd.f32 %v808, %v928
  %v945 = vadd.f32 %v809, %v929
  %v946 = vadd.f32 %v810, %v930
  %v947 = vadd.f32 %v811, %v931
  %v948 = vadd.f32 %v812, %v932
  %v949 = vadd.f32 %v813, %v933
  %v950 = vadd.f32 %v814, %v934
  %v951 = vadd.f32 %v815, %v935
  %v952 = vadd.f32 %v816, %v936
  %953 = vrot.lane.b32.xlu0 %v352, 127
  %v954 = vpop.permute.xlu0 %953
  %955 = vrot.lane.b32.xlu0 %v356, 127
  %v956 = vpop.permute.xlu0 %955
  %957 = vrot.lane.b32.xlu0 %v360, 127
  %v958 = vpop.permute.xlu0 %957
  %959 = vrot.lane.b32.xlu0 %v364, 127
  %v960 = vpop.permute.xlu0 %959
  %961 = vrot.lane.b32.xlu0 %v353, 127
  %v962 = vpop.permute.xlu0 %961
  %963 = vrot.lane.b32.xlu0 %v357, 127
  %v964 = vpop.permute.xlu0 %963
  %965 = vrot.lane.b32.xlu0 %v361, 127
  %v966 = vpop.permute.xlu0 %965
  %967 = vrot.lane.b32.xlu0 %v365, 127
  %v968 = vpop.permute.xlu0 %967
  %969 = vrot.lane.b32.xlu0 %v354, 127
  %v970 = vpop.permute.xlu0 %969
  %971 = vrot.lane.b32.xlu0 %v358, 127
  %v972 = vpop.permute.xlu0 %971
  %973 = vrot.lane.b32.xlu0 %v362, 127
  %v974 = vpop.permute.xlu0 %973
  %975 = vrot.lane.b32.xlu0 %v366, 127
  %v976 = vpop.permute.xlu0 %975
  %977 = vrot.lane.b32.xlu0 %v355, 127
  %v978 = vpop.permute.xlu0 %977
  %979 = vrot.lane.b32.xlu0 %v359, 127
  %v980 = vpop.permute.xlu0 %979
  %981 = vrot.lane.b32.xlu0 %v363, 127
  %v982 = vpop.permute.xlu0 %981
  %983 = vrot.lane.b32.xlu0 %v367, 127
  %v984 = vpop.permute.xlu0 %983
  %vm985 = vcmp.lt.s32.totalorder %v441, 127
  %v986 = vsel %vm985, %v970, %v978
  %v987 = vsel %vm985, %v972, %v980
  %v988 = vsel %vm985, %v974, %v982
  %v989 = vsel %vm985, %v976, %v984
  %v990 = vsel %vm985, %v962, %v970
  %v991 = vsel %vm985, %v964, %v972
  %v992 = vsel %vm985, %v966, %v974
  %v993 = vsel %vm985, %v968, %v976
  %v994 = vsel %vm985, %v954, %v962
  %v995 = vsel %vm985, %v956, %v964
  %v996 = vsel %vm985, %v958, %v966
  %v997 = vsel %vm985, %v960, %v968
  %v998 = vsel %vm985, %v978, %v954
  %v999 = vsel %vm985, %v980, %v956
  %v1000 = vsel %vm985, %v982, %v958
  %v1001 = vsel %vm985, %v984, %v960
  %s1002 = scalar_lea.vmem %s3, 5
  %v1003 = vld [vmem:[%s1002] ss:$8 sm:$0xf]
  %v1005 = vlaneseq
  %v1006 = vshrl.u32 %v1005, 7
  %v1007 = vsub.s32 0, %v1006
  %v1008 = vrot.slane %v1003, %v1007
  %v1009 = vlaneseq
  %v1010 = vshrl.u32 %v1009, 7
  %v1011 = vsub.s32 1, %v1010
  %v1012 = vrot.slane %v1003, %v1011
  %v1013 = vlaneseq
  %v1014 = vshrl.u32 %v1013, 7
  %v1015 = vsub.s32 2, %v1014
  %v1016 = vrot.slane %v1003, %v1015
  %v1017 = vlaneseq
  %v1018 = vshrl.u32 %v1017, 7
  %v1019 = vsub.s32 3, %v1018
  %v1020 = vrot.slane %v1003, %v1019
  %v1025 = vmul.f32 %v994, %v1008
  %v1026 = vmul.f32 %v990, %v1012
  %v1027 = vmul.f32 %v986, %v1016
  %v1028 = vmul.f32 %v998, %v1020
  %v1029 = vmul.f32 %v995, %v1008
  %v1030 = vmul.f32 %v991, %v1012
  %v1031 = vmul.f32 %v987, %v1016
  %v1032 = vmul.f32 %v999, %v1020
  %v1033 = vmul.f32 %v996, %v1008
  %v1034 = vmul.f32 %v992, %v1012
  %v1035 = vmul.f32 %v988, %v1016
  %v1036 = vmul.f32 %v1000, %v1020
  %v1037 = vmul.f32 %v997, %v1008
  %v1038 = vmul.f32 %v993, %v1012
  %v1039 = vmul.f32 %v989, %v1016
  %v1040 = vmul.f32 %v1001, %v1020
  %1041 = vset.pattern.permute.xlu0 5
  %1042 = vperm.xlu0 %1041, %v368
  %v1043 = vpop.permute.xlu0 %1042
  %1045 = vset.pattern.permute.xlu0 5
  %1046 = vperm.xlu0 %1045, %v369
  %v1047 = vpop.permute.xlu0 %1046
  %1049 = vset.pattern.permute.xlu0 5
  %1050 = vperm.xlu0 %1049, %v370
  %v1051 = vpop.permute.xlu0 %1050
  %1053 = vset.pattern.permute.xlu0 5
  %1054 = vperm.xlu0 %1053, %v371
  %v1055 = vpop.permute.xlu0 %1054
  %v1057 = vmul.f32 %v1025, %v1043
  %v1058 = vmul.f32 %v1026, %v1043
  %v1059 = vmul.f32 %v1027, %v1043
  %v1060 = vmul.f32 %v1028, %v1043
  %v1061 = vmul.f32 %v1029, %v1047
  %v1062 = vmul.f32 %v1030, %v1047
  %v1063 = vmul.f32 %v1031, %v1047
  %v1064 = vmul.f32 %v1032, %v1047
  %v1065 = vmul.f32 %v1033, %v1051
  %v1066 = vmul.f32 %v1034, %v1051
  %v1067 = vmul.f32 %v1035, %v1051
  %v1068 = vmul.f32 %v1036, %v1051
  %v1069 = vmul.f32 %v1037, %v1055
  %v1070 = vmul.f32 %v1038, %v1055
  %v1071 = vmul.f32 %v1039, %v1055
  %v1072 = vmul.f32 %v1040, %v1055
  %v1073 = vadd.f32 %v937, %v1057
  %v1074 = vadd.f32 %v938, %v1058
  %v1075 = vadd.f32 %v939, %v1059
  %v1076 = vadd.f32 %v940, %v1060
  %v1077 = vadd.f32 %v941, %v1061
  %v1078 = vadd.f32 %v942, %v1062
  %v1079 = vadd.f32 %v943, %v1063
  %v1080 = vadd.f32 %v944, %v1064
  %v1081 = vadd.f32 %v945, %v1065
  %v1082 = vadd.f32 %v946, %v1066
  %v1083 = vadd.f32 %v947, %v1067
  %v1084 = vadd.f32 %v948, %v1068
  %v1085 = vadd.f32 %v949, %v1069
  %v1086 = vadd.f32 %v950, %v1070
  %v1087 = vadd.f32 %v951, %v1071
  %v1088 = vadd.f32 %v952, %v1072
  %1089 = vrot.lane.b32.xlu0 %v352, 113
  %v1090 = vpop.permute.xlu0 %1089
  %1091 = vrot.lane.b32.xlu0 %v356, 113
  %v1092 = vpop.permute.xlu0 %1091
  %1093 = vrot.lane.b32.xlu0 %v360, 113
  %v1094 = vpop.permute.xlu0 %1093
  %1095 = vrot.lane.b32.xlu0 %v364, 113
  %v1096 = vpop.permute.xlu0 %1095
  %1097 = vrot.lane.b32.xlu0 %v353, 113
  %v1098 = vpop.permute.xlu0 %1097
  %1099 = vrot.lane.b32.xlu0 %v357, 113
  %v1100 = vpop.permute.xlu0 %1099
  %1101 = vrot.lane.b32.xlu0 %v361, 113
  %v1102 = vpop.permute.xlu0 %1101
  %1103 = vrot.lane.b32.xlu0 %v365, 113
  %v1104 = vpop.permute.xlu0 %1103
  %1105 = vrot.lane.b32.xlu0 %v354, 113
  %v1106 = vpop.permute.xlu0 %1105
  %1107 = vrot.lane.b32.xlu0 %v358, 113
  %v1108 = vpop.permute.xlu0 %1107
  %1109 = vrot.lane.b32.xlu0 %v362, 113
  %v1110 = vpop.permute.xlu0 %1109
  %1111 = vrot.lane.b32.xlu0 %v366, 113
  %v1112 = vpop.permute.xlu0 %1111
  %1113 = vrot.lane.b32.xlu0 %v355, 113
  %v1114 = vpop.permute.xlu0 %1113
  %1115 = vrot.lane.b32.xlu0 %v359, 113
  %v1116 = vpop.permute.xlu0 %1115
  %1117 = vrot.lane.b32.xlu0 %v363, 113
  %v1118 = vpop.permute.xlu0 %1117
  %1119 = vrot.lane.b32.xlu0 %v367, 113
  %v1120 = vpop.permute.xlu0 %1119
  %vm1121 = vcmp.lt.s32.totalorder %v441, 113
  %v1122 = vsel %vm1121, %v1106, %v1114
  %v1123 = vsel %vm1121, %v1108, %v1116
  %v1124 = vsel %vm1121, %v1110, %v1118
  %v1125 = vsel %vm1121, %v1112, %v1120
  %v1126 = vsel %vm1121, %v1098, %v1106
  %v1127 = vsel %vm1121, %v1100, %v1108
  %v1128 = vsel %vm1121, %v1102, %v1110
  %v1129 = vsel %vm1121, %v1104, %v1112
  %v1130 = vsel %vm1121, %v1090, %v1098
  %v1131 = vsel %vm1121, %v1092, %v1100
  %v1132 = vsel %vm1121, %v1094, %v1102
  %v1133 = vsel %vm1121, %v1096, %v1104
  %v1134 = vsel %vm1121, %v1114, %v1090
  %v1135 = vsel %vm1121, %v1116, %v1092
  %v1136 = vsel %vm1121, %v1118, %v1094
  %v1137 = vsel %vm1121, %v1120, %v1096
  %s1138 = scalar_lea.vmem %s3, 6
  %v1139 = vld [vmem:[%s1138] ss:$8 sm:$0xf]
  %v1141 = vlaneseq
  %v1142 = vshrl.u32 %v1141, 7
  %v1143 = vsub.s32 0, %v1142
  %v1144 = vrot.slane %v1139, %v1143
  %v1145 = vlaneseq
  %v1146 = vshrl.u32 %v1145, 7
  %v1147 = vsub.s32 1, %v1146
  %v1148 = vrot.slane %v1139, %v1147
  %v1149 = vlaneseq
  %v1150 = vshrl.u32 %v1149, 7
  %v1151 = vsub.s32 2, %v1150
  %v1152 = vrot.slane %v1139, %v1151
  %v1153 = vlaneseq
  %v1154 = vshrl.u32 %v1153, 7
  %v1155 = vsub.s32 3, %v1154
  %v1156 = vrot.slane %v1139, %v1155
  %v1161 = vmul.f32 %v1130, %v1144
  %v1162 = vmul.f32 %v1126, %v1148
  %v1163 = vmul.f32 %v1122, %v1152
  %v1164 = vmul.f32 %v1134, %v1156
  %v1165 = vmul.f32 %v1131, %v1144
  %v1166 = vmul.f32 %v1127, %v1148
  %v1167 = vmul.f32 %v1123, %v1152
  %v1168 = vmul.f32 %v1135, %v1156
  %v1169 = vmul.f32 %v1132, %v1144
  %v1170 = vmul.f32 %v1128, %v1148
  %v1171 = vmul.f32 %v1124, %v1152
  %v1172 = vmul.f32 %v1136, %v1156
  %v1173 = vmul.f32 %v1133, %v1144
  %v1174 = vmul.f32 %v1129, %v1148
  %v1175 = vmul.f32 %v1125, %v1152
  %v1176 = vmul.f32 %v1137, %v1156
  %1177 = vset.pattern.permute.xlu0 6
  %1178 = vperm.xlu0 %1177, %v368
  %v1179 = vpop.permute.xlu0 %1178
  %1181 = vset.pattern.permute.xlu0 6
  %1182 = vperm.xlu0 %1181, %v369
  %v1183 = vpop.permute.xlu0 %1182
  %1185 = vset.pattern.permute.xlu0 6
  %1186 = vperm.xlu0 %1185, %v370
  %v1187 = vpop.permute.xlu0 %1186
  %1189 = vset.pattern.permute.xlu0 6
  %1190 = vperm.xlu0 %1189, %v371
  %v1191 = vpop.permute.xlu0 %1190
  %v1193 = vmul.f32 %v1161, %v1179
  %v1194 = vmul.f32 %v1162, %v1179
  %v1195 = vmul.f32 %v1163, %v1179
  %v1196 = vmul.f32 %v1164, %v1179
  %v1197 = vmul.f32 %v1165, %v1183
  %v1198 = vmul.f32 %v1166, %v1183
  %v1199 = vmul.f32 %v1167, %v1183
  %v1200 = vmul.f32 %v1168, %v1183
  %v1201 = vmul.f32 %v1169, %v1187
  %v1202 = vmul.f32 %v1170, %v1187
  %v1203 = vmul.f32 %v1171, %v1187
  %v1204 = vmul.f32 %v1172, %v1187
  %v1205 = vmul.f32 %v1173, %v1191
  %v1206 = vmul.f32 %v1174, %v1191
  %v1207 = vmul.f32 %v1175, %v1191
  %v1208 = vmul.f32 %v1176, %v1191
  %v1209 = vadd.f32 %v1073, %v1193
  %v1210 = vadd.f32 %v1074, %v1194
  %v1211 = vadd.f32 %v1075, %v1195
  %v1212 = vadd.f32 %v1076, %v1196
  %v1213 = vadd.f32 %v1077, %v1197
  %v1214 = vadd.f32 %v1078, %v1198
  %v1215 = vadd.f32 %v1079, %v1199
  %v1216 = vadd.f32 %v1080, %v1200
  %v1217 = vadd.f32 %v1081, %v1201
  %v1218 = vadd.f32 %v1082, %v1202
  %v1219 = vadd.f32 %v1083, %v1203
  %v1220 = vadd.f32 %v1084, %v1204
  %v1221 = vadd.f32 %v1085, %v1205
  %v1222 = vadd.f32 %v1086, %v1206
  %v1223 = vadd.f32 %v1087, %v1207
  %v1224 = vadd.f32 %v1088, %v1208
  %1225 = vrot.lane.b32.xlu0 %v352, 112
  %v1226 = vpop.permute.xlu0 %1225
  %1227 = vrot.lane.b32.xlu0 %v356, 112
  %v1228 = vpop.permute.xlu0 %1227
  %1229 = vrot.lane.b32.xlu0 %v360, 112
  %v1230 = vpop.permute.xlu0 %1229
  %1231 = vrot.lane.b32.xlu0 %v364, 112
  %v1232 = vpop.permute.xlu0 %1231
  %1233 = vrot.lane.b32.xlu0 %v353, 112
  %v1234 = vpop.permute.xlu0 %1233
  %1235 = vrot.lane.b32.xlu0 %v357, 112
  %v1236 = vpop.permute.xlu0 %1235
  %1237 = vrot.lane.b32.xlu0 %v361, 112
  %v1238 = vpop.permute.xlu0 %1237
  %1239 = vrot.lane.b32.xlu0 %v365, 112
  %v1240 = vpop.permute.xlu0 %1239
  %1241 = vrot.lane.b32.xlu0 %v354, 112
  %v1242 = vpop.permute.xlu0 %1241
  %1243 = vrot.lane.b32.xlu0 %v358, 112
  %v1244 = vpop.permute.xlu0 %1243
  %1245 = vrot.lane.b32.xlu0 %v362, 112
  %v1246 = vpop.permute.xlu0 %1245
  %1247 = vrot.lane.b32.xlu0 %v366, 112
  %v1248 = vpop.permute.xlu0 %1247
  %1249 = vrot.lane.b32.xlu0 %v355, 112
  %v1250 = vpop.permute.xlu0 %1249
  %1251 = vrot.lane.b32.xlu0 %v359, 112
  %v1252 = vpop.permute.xlu0 %1251
  %1253 = vrot.lane.b32.xlu0 %v363, 112
  %v1254 = vpop.permute.xlu0 %1253
  %1255 = vrot.lane.b32.xlu0 %v367, 112
  %v1256 = vpop.permute.xlu0 %1255
  %vm1257 = vcmp.lt.s32.totalorder %v441, 112
  %v1258 = vsel %vm1257, %v1242, %v1250
  %v1259 = vsel %vm1257, %v1244, %v1252
  %v1260 = vsel %vm1257, %v1246, %v1254
  %v1261 = vsel %vm1257, %v1248, %v1256
  %v1262 = vsel %vm1257, %v1234, %v1242
  %v1263 = vsel %vm1257, %v1236, %v1244
  %v1264 = vsel %vm1257, %v1238, %v1246
  %v1265 = vsel %vm1257, %v1240, %v1248
  %v1266 = vsel %vm1257, %v1226, %v1234
  %v1267 = vsel %vm1257, %v1228, %v1236
  %v1268 = vsel %vm1257, %v1230, %v1238
  %v1269 = vsel %vm1257, %v1232, %v1240
  %v1270 = vsel %vm1257, %v1250, %v1226
  %v1271 = vsel %vm1257, %v1252, %v1228
  %v1272 = vsel %vm1257, %v1254, %v1230
  %v1273 = vsel %vm1257, %v1256, %v1232
  %s1274 = scalar_lea.vmem %s3, 7
  %v1275 = vld [vmem:[%s1274] ss:$8 sm:$0xf]
  %v1277 = vlaneseq
  %v1278 = vshrl.u32 %v1277, 7
  %v1279 = vsub.s32 0, %v1278
  %v1280 = vrot.slane %v1275, %v1279
  %v1281 = vlaneseq
  %v1282 = vshrl.u32 %v1281, 7
  %v1283 = vsub.s32 1, %v1282
  %v1284 = vrot.slane %v1275, %v1283
  %v1285 = vlaneseq
  %v1286 = vshrl.u32 %v1285, 7
  %v1287 = vsub.s32 2, %v1286
  %v1288 = vrot.slane %v1275, %v1287
  %v1289 = vlaneseq
  %v1290 = vshrl.u32 %v1289, 7
  %v1291 = vsub.s32 3, %v1290
  %v1292 = vrot.slane %v1275, %v1291
  %v1297 = vmul.f32 %v1266, %v1280
  %v1298 = vmul.f32 %v1262, %v1284
  %v1299 = vmul.f32 %v1258, %v1288
  %v1300 = vmul.f32 %v1270, %v1292
  %v1301 = vmul.f32 %v1267, %v1280
  %v1302 = vmul.f32 %v1263, %v1284
  %v1303 = vmul.f32 %v1259, %v1288
  %v1304 = vmul.f32 %v1271, %v1292
  %v1305 = vmul.f32 %v1268, %v1280
  %v1306 = vmul.f32 %v1264, %v1284
  %v1307 = vmul.f32 %v1260, %v1288
  %v1308 = vmul.f32 %v1272, %v1292
  %v1309 = vmul.f32 %v1269, %v1280
  %v1310 = vmul.f32 %v1265, %v1284
  %v1311 = vmul.f32 %v1261, %v1288
  %v1312 = vmul.f32 %v1273, %v1292
  %1313 = vset.pattern.permute.xlu0 7
  %1314 = vperm.xlu0 %1313, %v368
  %v1315 = vpop.permute.xlu0 %1314
  %1317 = vset.pattern.permute.xlu0 7
  %1318 = vperm.xlu0 %1317, %v369
  %v1319 = vpop.permute.xlu0 %1318
  %1321 = vset.pattern.permute.xlu0 7
  %1322 = vperm.xlu0 %1321, %v370
  %v1323 = vpop.permute.xlu0 %1322
  %1325 = vset.pattern.permute.xlu0 7
  %1326 = vperm.xlu0 %1325, %v371
  %v1327 = vpop.permute.xlu0 %1326
  %v1329 = vmul.f32 %v1297, %v1315
  %v1330 = vmul.f32 %v1298, %v1315
  %v1331 = vmul.f32 %v1299, %v1315
  %v1332 = vmul.f32 %v1300, %v1315
  %v1333 = vmul.f32 %v1301, %v1319
  %v1334 = vmul.f32 %v1302, %v1319
  %v1335 = vmul.f32 %v1303, %v1319
  %v1336 = vmul.f32 %v1304, %v1319
  %v1337 = vmul.f32 %v1305, %v1323
  %v1338 = vmul.f32 %v1306, %v1323
  %v1339 = vmul.f32 %v1307, %v1323
  %v1340 = vmul.f32 %v1308, %v1323
  %v1341 = vmul.f32 %v1309, %v1327
  %v1342 = vmul.f32 %v1310, %v1327
  %v1343 = vmul.f32 %v1311, %v1327
  %v1344 = vmul.f32 %v1312, %v1327
  %v1345 = vadd.f32 %v1209, %v1329
  %v1346 = vadd.f32 %v1210, %v1330
  %v1347 = vadd.f32 %v1211, %v1331
  %v1348 = vadd.f32 %v1212, %v1332
  %v1349 = vadd.f32 %v1213, %v1333
  %v1350 = vadd.f32 %v1214, %v1334
  %v1351 = vadd.f32 %v1215, %v1335
  %v1352 = vadd.f32 %v1216, %v1336
  %v1353 = vadd.f32 %v1217, %v1337
  %v1354 = vadd.f32 %v1218, %v1338
  %v1355 = vadd.f32 %v1219, %v1339
  %v1356 = vadd.f32 %v1220, %v1340
  %v1357 = vadd.f32 %v1221, %v1341
  %v1358 = vadd.f32 %v1222, %v1342
  %v1359 = vadd.f32 %v1223, %v1343
  %v1360 = vadd.f32 %v1224, %v1344
  %1361 = vrot.lane.b32.xlu0 %v352, 111
  %v1362 = vpop.permute.xlu0 %1361
  %1363 = vrot.lane.b32.xlu0 %v356, 111
  %v1364 = vpop.permute.xlu0 %1363
  %1365 = vrot.lane.b32.xlu0 %v360, 111
  %v1366 = vpop.permute.xlu0 %1365
  %1367 = vrot.lane.b32.xlu0 %v364, 111
  %v1368 = vpop.permute.xlu0 %1367
  %1369 = vrot.lane.b32.xlu0 %v353, 111
  %v1370 = vpop.permute.xlu0 %1369
  %1371 = vrot.lane.b32.xlu0 %v357, 111
  %v1372 = vpop.permute.xlu0 %1371
  %1373 = vrot.lane.b32.xlu0 %v361, 111
  %v1374 = vpop.permute.xlu0 %1373
  %1375 = vrot.lane.b32.xlu0 %v365, 111
  %v1376 = vpop.permute.xlu0 %1375
  %1377 = vrot.lane.b32.xlu0 %v354, 111
  %v1378 = vpop.permute.xlu0 %1377
  %1379 = vrot.lane.b32.xlu0 %v358, 111
  %v1380 = vpop.permute.xlu0 %1379
  %1381 = vrot.lane.b32.xlu0 %v362, 111
  %v1382 = vpop.permute.xlu0 %1381
  %1383 = vrot.lane.b32.xlu0 %v366, 111
  %v1384 = vpop.permute.xlu0 %1383
  %1385 = vrot.lane.b32.xlu0 %v355, 111
  %v1386 = vpop.permute.xlu0 %1385
  %1387 = vrot.lane.b32.xlu0 %v359, 111
  %v1388 = vpop.permute.xlu0 %1387
  %1389 = vrot.lane.b32.xlu0 %v363, 111
  %v1390 = vpop.permute.xlu0 %1389
  %1391 = vrot.lane.b32.xlu0 %v367, 111
  %v1392 = vpop.permute.xlu0 %1391
  %vm1393 = vcmp.lt.s32.totalorder %v441, 111
  %v1394 = vsel %vm1393, %v1378, %v1386
  %v1395 = vsel %vm1393, %v1380, %v1388
  %v1396 = vsel %vm1393, %v1382, %v1390
  %v1397 = vsel %vm1393, %v1384, %v1392
  %v1398 = vsel %vm1393, %v1370, %v1378
  %v1399 = vsel %vm1393, %v1372, %v1380
  %v1400 = vsel %vm1393, %v1374, %v1382
  %v1401 = vsel %vm1393, %v1376, %v1384
  %v1402 = vsel %vm1393, %v1362, %v1370
  %v1403 = vsel %vm1393, %v1364, %v1372
  %v1404 = vsel %vm1393, %v1366, %v1374
  %v1405 = vsel %vm1393, %v1368, %v1376
  %v1406 = vsel %vm1393, %v1386, %v1362
  %v1407 = vsel %vm1393, %v1388, %v1364
  %v1408 = vsel %vm1393, %v1390, %v1366
  %v1409 = vsel %vm1393, %v1392, %v1368
  %s1410 = scalar_lea.vmem %s3, 32
  %v1411 = vld [vmem:[%s1410] ss:$8 sm:$0xf]
  %v1413 = vlaneseq
  %v1414 = vshrl.u32 %v1413, 7
  %v1415 = vsub.s32 0, %v1414
  %v1416 = vrot.slane %v1411, %v1415
  %v1417 = vlaneseq
  %v1418 = vshrl.u32 %v1417, 7
  %v1419 = vsub.s32 1, %v1418
  %v1420 = vrot.slane %v1411, %v1419
  %v1421 = vlaneseq
  %v1422 = vshrl.u32 %v1421, 7
  %v1423 = vsub.s32 2, %v1422
  %v1424 = vrot.slane %v1411, %v1423
  %v1425 = vlaneseq
  %v1426 = vshrl.u32 %v1425, 7
  %v1427 = vsub.s32 3, %v1426
  %v1428 = vrot.slane %v1411, %v1427
  %v1433 = vmul.f32 %v1402, %v1416
  %v1434 = vmul.f32 %v1398, %v1420
  %v1435 = vmul.f32 %v1394, %v1424
  %v1436 = vmul.f32 %v1406, %v1428
  %v1437 = vmul.f32 %v1403, %v1416
  %v1438 = vmul.f32 %v1399, %v1420
  %v1439 = vmul.f32 %v1395, %v1424
  %v1440 = vmul.f32 %v1407, %v1428
  %v1441 = vmul.f32 %v1404, %v1416
  %v1442 = vmul.f32 %v1400, %v1420
  %v1443 = vmul.f32 %v1396, %v1424
  %v1444 = vmul.f32 %v1408, %v1428
  %v1445 = vmul.f32 %v1405, %v1416
  %v1446 = vmul.f32 %v1401, %v1420
  %v1447 = vmul.f32 %v1397, %v1424
  %v1448 = vmul.f32 %v1409, %v1428
  %1449 = vset.pattern.permute.xlu0 8
  %1450 = vperm.xlu0 %1449, %v368
  %v1451 = vpop.permute.xlu0 %1450
  %1453 = vset.pattern.permute.xlu0 8
  %1454 = vperm.xlu0 %1453, %v369
  %v1455 = vpop.permute.xlu0 %1454
  %1457 = vset.pattern.permute.xlu0 8
  %1458 = vperm.xlu0 %1457, %v370
  %v1459 = vpop.permute.xlu0 %1458
  %1461 = vset.pattern.permute.xlu0 8
  %1462 = vperm.xlu0 %1461, %v371
  %v1463 = vpop.permute.xlu0 %1462
  %v1465 = vmul.f32 %v1433, %v1451
  %v1466 = vmul.f32 %v1434, %v1451
  %v1467 = vmul.f32 %v1435, %v1451
  %v1468 = vmul.f32 %v1436, %v1451
  %v1469 = vmul.f32 %v1437, %v1455
  %v1470 = vmul.f32 %v1438, %v1455
  %v1471 = vmul.f32 %v1439, %v1455
  %v1472 = vmul.f32 %v1440, %v1455
  %v1473 = vmul.f32 %v1441, %v1459
  %v1474 = vmul.f32 %v1442, %v1459
  %v1475 = vmul.f32 %v1443, %v1459
  %v1476 = vmul.f32 %v1444, %v1459
  %v1477 = vmul.f32 %v1445, %v1463
  %v1478 = vmul.f32 %v1446, %v1463
  %v1479 = vmul.f32 %v1447, %v1463
  %v1480 = vmul.f32 %v1448, %v1463
  %v1481 = vadd.f32 %v1345, %v1465
  %v1482 = vadd.f32 %v1346, %v1466
  %v1483 = vadd.f32 %v1347, %v1467
  %v1484 = vadd.f32 %v1348, %v1468
  %v1485 = vadd.f32 %v1349, %v1469
  %v1486 = vadd.f32 %v1350, %v1470
  %v1487 = vadd.f32 %v1351, %v1471
  %v1488 = vadd.f32 %v1352, %v1472
  %v1489 = vadd.f32 %v1353, %v1473
  %v1490 = vadd.f32 %v1354, %v1474
  %v1491 = vadd.f32 %v1355, %v1475
  %v1492 = vadd.f32 %v1356, %v1476
  %v1493 = vadd.f32 %v1357, %v1477
  %v1494 = vadd.f32 %v1358, %v1478
  %v1495 = vadd.f32 %v1359, %v1479
  %v1496 = vadd.f32 %v1360, %v1480
  %1497 = vset.pattern.permute.xlu0 1
  %1498 = vperm.xlu0 %1497, %v36
  %v1499 = vpop.permute.xlu0 %1498
  %1501 = vset.pattern.permute.xlu0 1
  %1502 = vperm.xlu0 %1501, %v37
  %v1503 = vpop.permute.xlu0 %1502
  %1505 = vset.pattern.permute.xlu0 1
  %1506 = vperm.xlu0 %1505, %v38
  %v1507 = vpop.permute.xlu0 %1506
  %1509 = vset.pattern.permute.xlu0 1
  %1510 = vperm.xlu0 %1509, %v39
  %v1511 = vpop.permute.xlu0 %1510
  %v1513 = vadd.f32 %v1481, %v1499
  %v1514 = vadd.f32 %v1482, %v1499
  %v1515 = vadd.f32 %v1483, %v1499
  %v1516 = vadd.f32 %v1484, %v1499
  %v1517 = vadd.f32 %v1485, %v1503
  %v1518 = vadd.f32 %v1486, %v1503
  %v1519 = vadd.f32 %v1487, %v1503
  %v1520 = vadd.f32 %v1488, %v1503
  %v1521 = vadd.f32 %v1489, %v1507
  %v1522 = vadd.f32 %v1490, %v1507
  %v1523 = vadd.f32 %v1491, %v1507
  %v1524 = vadd.f32 %v1492, %v1507
  %v1525 = vadd.f32 %v1493, %v1511
  %v1526 = vadd.f32 %v1494, %v1511
  %v1527 = vadd.f32 %v1495, %v1511
  %v1528 = vadd.f32 %v1496, %v1511
  %v1529 = vxor.u32 %v1513, 2147483648
  %v1530 = vxor.u32 %v1514, 2147483648
  %v1531 = vxor.u32 %v1515, 2147483648
  %v1532 = vxor.u32 %v1516, 2147483648
  %v1533 = vxor.u32 %v1517, 2147483648
  %v1534 = vxor.u32 %v1518, 2147483648
  %v1535 = vxor.u32 %v1519, 2147483648
  %v1536 = vxor.u32 %v1520, 2147483648
  %v1537 = vxor.u32 %v1521, 2147483648
  %v1538 = vxor.u32 %v1522, 2147483648
  %v1539 = vxor.u32 %v1523, 2147483648
  %v1540 = vxor.u32 %v1524, 2147483648
  %v1541 = vxor.u32 %v1525, 2147483648
  %v1542 = vxor.u32 %v1526, 2147483648
  %v1543 = vxor.u32 %v1527, 2147483648
  %v1544 = vxor.u32 %v1528, 2147483648
  %v1545 = vmul.f32 %v1529, 1.442695
  %v1546 = vpow.pop %v1545
  %v1547 = vmul.f32 %v1530, 1.442695
  %v1548 = vpow.pop %v1547
  %v1549 = vmul.f32 %v1531, 1.442695
  %v1550 = vpow.pop %v1549
  %v1551 = vmul.f32 %v1532, 1.442695
  %v1552 = vpow.pop %v1551
  %v1553 = vmul.f32 %v1533, 1.442695
  %v1554 = vpow.pop %v1553
  %v1555 = vmul.f32 %v1534, 1.442695
  %v1556 = vpow.pop %v1555
  %v1557 = vmul.f32 %v1535, 1.442695
  %v1558 = vpow.pop %v1557
  %v1559 = vmul.f32 %v1536, 1.442695
  %v1560 = vpow.pop %v1559
  %v1561 = vmul.f32 %v1537, 1.442695
  %v1562 = vpow.pop %v1561
  %v1563 = vmul.f32 %v1538, 1.442695
  %v1564 = vpow.pop %v1563
  %v1565 = vmul.f32 %v1539, 1.442695
  %v1566 = vpow.pop %v1565
  %v1567 = vmul.f32 %v1540, 1.442695
  %v1568 = vpow.pop %v1567
  %v1569 = vmul.f32 %v1541, 1.442695
  %v1570 = vpow.pop %v1569
  %v1571 = vmul.f32 %v1542, 1.442695
  %v1572 = vpow.pop %v1571
  %v1573 = vmul.f32 %v1543, 1.442695
  %v1574 = vpow.pop %v1573
  %v1575 = vmul.f32 %v1544, 1.442695
  %v1576 = vpow.pop %v1575
  %v1577 = vadd.f32 %v1546, 1.0
  %v1578 = vadd.f32 %v1548, 1.0
  %v1579 = vadd.f32 %v1550, 1.0
  %v1580 = vadd.f32 %v1552, 1.0
  %v1581 = vadd.f32 %v1554, 1.0
  %v1582 = vadd.f32 %v1556, 1.0
  %v1583 = vadd.f32 %v1558, 1.0
  %v1584 = vadd.f32 %v1560, 1.0
  %v1585 = vadd.f32 %v1562, 1.0
  %v1586 = vadd.f32 %v1564, 1.0
  %v1587 = vadd.f32 %v1566, 1.0
  %v1588 = vadd.f32 %v1568, 1.0
  %v1589 = vadd.f32 %v1570, 1.0
  %v1590 = vadd.f32 %v1572, 1.0
  %v1591 = vadd.f32 %v1574, 1.0
  %v1592 = vadd.f32 %v1576, 1.0
  %v1593 = vrcp.pop %v1577
  %v1594 = vmul.f32 1.0, %v1593
  %v1595 = vrcp.pop %v1578
  %v1596 = vmul.f32 1.0, %v1595
  %v1597 = vrcp.pop %v1579
  %v1598 = vmul.f32 1.0, %v1597
  %v1599 = vrcp.pop %v1580
  %v1600 = vmul.f32 1.0, %v1599
  %v1601 = vrcp.pop %v1581
  %v1602 = vmul.f32 1.0, %v1601
  %v1603 = vrcp.pop %v1582
  %v1604 = vmul.f32 1.0, %v1603
  %v1605 = vrcp.pop %v1583
  %v1606 = vmul.f32 1.0, %v1605
  %v1607 = vrcp.pop %v1584
  %v1608 = vmul.f32 1.0, %v1607
  %v1609 = vrcp.pop %v1585
  %v1610 = vmul.f32 1.0, %v1609
  %v1611 = vrcp.pop %v1586
  %v1612 = vmul.f32 1.0, %v1611
  %v1613 = vrcp.pop %v1587
  %v1614 = vmul.f32 1.0, %v1613
  %v1615 = vrcp.pop %v1588
  %v1616 = vmul.f32 1.0, %v1615
  %v1617 = vrcp.pop %v1589
  %v1618 = vmul.f32 1.0, %v1617
  %v1619 = vrcp.pop %v1590
  %v1620 = vmul.f32 1.0, %v1619
  %v1621 = vrcp.pop %v1591
  %v1622 = vmul.f32 1.0, %v1621
  %v1623 = vrcp.pop %v1592
  %v1624 = vmul.f32 1.0, %v1623
  %v1625 = vmul.f32 %v1513, %v1594
  %v1626 = vmul.f32 %v1514, %v1596
  %v1627 = vmul.f32 %v1515, %v1598
  %v1628 = vmul.f32 %v1516, %v1600
  %v1629 = vmul.f32 %v1517, %v1602
  %v1630 = vmul.f32 %v1518, %v1604
  %v1631 = vmul.f32 %v1519, %v1606
  %v1632 = vmul.f32 %v1520, %v1608
  %v1633 = vmul.f32 %v1521, %v1610
  %v1634 = vmul.f32 %v1522, %v1612
  %v1635 = vmul.f32 %v1523, %v1614
  %v1636 = vmul.f32 %v1524, %v1616
  %v1637 = vmul.f32 %v1525, %v1618
  %v1638 = vmul.f32 %v1526, %v1620
  %v1639 = vmul.f32 %v1527, %v1622
  %v1640 = vmul.f32 %v1528, %v1624
  %v1641 = vld [vmem:[%s7] sm:$0xff]
  %v1642 = vld [vmem:[%s7 + $0x8] sm:$0xff]
  %v1643 = vld [vmem:[%s7 + $0x10] sm:$0xff]
  %v1644 = vld [vmem:[%s7 + $0x18] sm:$0xff]
  %v1645 = vld [vmem:[%s7 + $0x20] sm:$0xff]
  %v1646 = vld [vmem:[%s7 + $0x28] sm:$0xff]
  %v1647 = vld [vmem:[%s7 + $0x30] sm:$0xff]
  %v1648 = vld [vmem:[%s7 + $0x38] sm:$0xff]
  %v1649 = vld [vmem:[%s7 + $0x40] sm:$0xff]
  %v1650 = vld [vmem:[%s7 + $0x48] sm:$0xff]
  %v1651 = vld [vmem:[%s7 + $0x50] sm:$0xff]
  %v1652 = vld [vmem:[%s7 + $0x58] sm:$0xff]
  %v1653 = vld [vmem:[%s7 + $0x60] sm:$0xff]
  %v1654 = vld [vmem:[%s7 + $0x68] sm:$0xff]
  %v1655 = vld [vmem:[%s7 + $0x70] sm:$0xff]
  %v1656 = vld [vmem:[%s7 + $0x78] sm:$0xff]
  %v1657 = vld [vmem:[%s7 + $0x80] sm:$0xff]
  %v1658 = vld [vmem:[%s7 + $0x88] sm:$0xff]
  %v1659 = vld [vmem:[%s7 + $0x90] sm:$0xff]
  %v1660 = vld [vmem:[%s7 + $0x98] sm:$0xff]
  %v1661 = vld [vmem:[%s7 + $0xa0] sm:$0xff]
  %v1662 = vld [vmem:[%s7 + $0xa8] sm:$0xff]
  %v1663 = vld [vmem:[%s7 + $0xb0] sm:$0xff]
  %v1664 = vld [vmem:[%s7 + $0xb8] sm:$0xff]
  %v1665 = vld [vmem:[%s7 + $0xc0] sm:$0xff]
  %v1666 = vld [vmem:[%s7 + $0xc8] sm:$0xff]
  %v1667 = vld [vmem:[%s7 + $0xd0] sm:$0xff]
  %v1668 = vld [vmem:[%s7 + $0xd8] sm:$0xff]
  %v1669 = vld [vmem:[%s7 + $0xe0] sm:$0xff]
  %v1670 = vld [vmem:[%s7 + $0xe8] sm:$0xff]
  %v1671 = vld [vmem:[%s7 + $0xf0] sm:$0xff]
  %v1672 = vld [vmem:[%s7 + $0xf8] sm:$0xff]
  %v1673 = vld [vmem:[%s7 + $0x100] sm:$0xff]
  %v1674 = vld [vmem:[%s7 + $0x108] sm:$0xff]
  %v1675 = vld [vmem:[%s7 + $0x110] sm:$0xff]
  %v1676 = vld [vmem:[%s7 + $0x118] sm:$0xff]
  %v1677 = vld [vmem:[%s7 + $0x120] sm:$0xff]
  %v1678 = vld [vmem:[%s7 + $0x128] sm:$0xff]
  %v1679 = vld [vmem:[%s7 + $0x130] sm:$0xff]
  %v1680 = vld [vmem:[%s7 + $0x138] sm:$0xff]
  %v1681 = vld [vmem:[%s7 + $0x140] sm:$0xff]
  %v1682 = vld [vmem:[%s7 + $0x148] sm:$0xff]
  %v1683 = vld [vmem:[%s7 + $0x150] sm:$0xff]
  %v1684 = vld [vmem:[%s7 + $0x158] sm:$0xff]
  %v1685 = vld [vmem:[%s7 + $0x160] sm:$0xff]
  %v1686 = vld [vmem:[%s7 + $0x168] sm:$0xff]
  %v1687 = vld [vmem:[%s7 + $0x170] sm:$0xff]
  %v1688 = vld [vmem:[%s7 + $0x178] sm:$0xff]
  %v1689 = vld [vmem:[%s7 + $0x180] sm:$0xff]
  %v1690 = vld [vmem:[%s7 + $0x188] sm:$0xff]
  %v1691 = vld [vmem:[%s7 + $0x190] sm:$0xff]
  %v1692 = vld [vmem:[%s7 + $0x198] sm:$0xff]
  %v1693 = vld [vmem:[%s7 + $0x1a0] sm:$0xff]
  %v1694 = vld [vmem:[%s7 + $0x1a8] sm:$0xff]
  %v1695 = vld [vmem:[%s7 + $0x1b0] sm:$0xff]
  %v1696 = vld [vmem:[%s7 + $0x1b8] sm:$0xff]
  %v1697 = vld [vmem:[%s7 + $0x1c0] sm:$0xff]
  %v1698 = vld [vmem:[%s7 + $0x1c8] sm:$0xff]
  %v1699 = vld [vmem:[%s7 + $0x1d0] sm:$0xff]
  %v1700 = vld [vmem:[%s7 + $0x1d8] sm:$0xff]
  %v1701 = vld [vmem:[%s7 + $0x1e0] sm:$0xff]
  %v1702 = vld [vmem:[%s7 + $0x1e8] sm:$0xff]
  %v1703 = vld [vmem:[%s7 + $0x1f0] sm:$0xff]
  %v1704 = vld [vmem:[%s7 + $0x1f8] sm:$0xff]
  %1705 = vmatprep.subr.mxu0 0.0
  %1706 = vmatpush1.msra.mxu0 %v1656
  %1707 = vmatprep.subr.mxu0 0.0
  %1708 = vmatpush1.msra.mxu0 %v1655
  %1709 = vmatprep.subr.mxu0 0.0
  %1710 = vmatpush1.msra.mxu0 %v1654
  %1711 = vmatprep.subr.mxu0 0.0
  %1712 = vmatpush1.msra.mxu0 %v1653
  %1713 = vmatprep.subr.mxu0 0.0
  %1714 = vmatpush1.msra.mxu0 %v1652
  %1715 = vmatprep.subr.mxu0 0.0
  %1716 = vmatpush1.msra.mxu0 %v1651
  %1717 = vmatprep.subr.mxu0 0.0
  %1718 = vmatpush1.msra.mxu0 %v1650
  %1719 = vmatprep.subr.mxu0 0.0
  %1720 = vmatpush1.msra.mxu0 %v1649
  %1721 = vmatprep.subr.mxu0 0.0
  %1722 = vmatpush1.msra.mxu0 %v1648
  %1723 = vmatprep.subr.mxu0 0.0
  %1724 = vmatpush1.msra.mxu0 %v1647
  %1725 = vmatprep.subr.mxu0 0.0
  %1726 = vmatpush1.msra.mxu0 %v1646
  %1727 = vmatprep.subr.mxu0 0.0
  %1728 = vmatpush1.msra.mxu0 %v1645
  %1729 = vmatprep.subr.mxu0 0.0
  %1730 = vmatpush1.msra.mxu0 %v1644
  %1731 = vmatprep.subr.mxu0 0.0
  %1732 = vmatpush1.msra.mxu0 %v1643
  %1733 = vmatprep.subr.mxu0 0.0
  %1734 = vmatpush1.msra.mxu0 %v1642
  %1735 = vmatprep.subr.mxu0 0.0
  %1736 = vmatpush1.msra.mxu0 %v1641
  %1737 = vmatprep.subr.mxu0 0.0
  %1738 = vmatpush2.msra.mxu0 %v1672
  %1739 = vmatprep.subr.mxu0 0.0
  %1740 = vmatpush2.msra.mxu0 %v1671
  %1741 = vmatprep.subr.mxu0 0.0
  %1742 = vmatpush2.msra.mxu0 %v1670
  %1743 = vmatprep.subr.mxu0 0.0
  %1744 = vmatpush2.msra.mxu0 %v1669
  %1745 = vmatprep.subr.mxu0 0.0
  %1746 = vmatpush2.msra.mxu0 %v1668
  %1747 = vmatprep.subr.mxu0 0.0
  %1748 = vmatpush2.msra.mxu0 %v1667
  %1749 = vmatprep.subr.mxu0 0.0
  %1750 = vmatpush2.msra.mxu0 %v1666
  %1751 = vmatprep.subr.mxu0 0.0
  %1752 = vmatpush2.msra.mxu0 %v1665
  %1753 = vmatprep.subr.mxu0 0.0
  %1754 = vmatpush2.msra.mxu0 %v1664
  %1755 = vmatprep.subr.mxu0 0.0
  %1756 = vmatpush2.msra.mxu0 %v1663
  %1757 = vmatprep.subr.mxu0 0.0
  %1758 = vmatpush2.msra.mxu0 %v1662
  %1759 = vmatprep.subr.mxu0 0.0
  %1760 = vmatpush2.msra.mxu0 %v1661
  %1761 = vmatprep.subr.mxu0 0.0
  %1762 = vmatpush2.msra.mxu0 %v1660
  %1763 = vmatprep.subr.mxu0 0.0
  %1764 = vmatpush2.msra.mxu0 %v1659
  %1765 = vmatprep.subr.mxu0 0.0
  %1766 = vmatpush2.msra.mxu0 %v1658
  %1767 = vmatprep.subr.mxu0 0.0
  %1768 = vmatpush2.msra.mxu0 %v1657
  %1769 = vmatprep.mubr.f32.mxu0 %v1626
  %1770 = vmatmul.mubr.f32.gmra.mxu0 %v1625
  %v1771 = vpop.f32.mrf.mxu0
  %v1772 = vadd.f32 0.0, %v1771
  %v1773 = vpop.f32.mrf.mxu0
  %1774 = vmatprep.mubr.f32.mxu0 %v1630
  %1775 = vmatmul.mubr.f32.gmra.mxu0 %v1629
  %v1776 = vpop.f32.mrf.mxu0
  %v1777 = vadd.f32 0.0, %v1776
  %v1778 = vpop.f32.mrf.mxu0
  %1779 = vmatprep.mubr.f32.mxu0 %v1634
  %1780 = vmatmul.mubr.f32.gmra.mxu0 %v1633
  %v1781 = vpop.f32.mrf.mxu0
  %v1782 = vadd.f32 0.0, %v1781
  %v1783 = vpop.f32.mrf.mxu0
  %1784 = vmatprep.mubr.f32.mxu0 %v1638
  %1785 = vmatmul.mubr.f32.gmra.mxu0 %v1637
  %v1786 = vpop.f32.mrf.mxu0
  %v1787 = vadd.f32 0.0, %v1786
  %v1788 = vpop.f32.mrf.mxu0
  %1789 = vdwg.mxu0
  %1790 = vmatprep.subr.mxu0 0.0
  %1791 = vmatpush1.msra.mxu0 %v1688
  %1792 = vmatprep.subr.mxu0 0.0
  %1793 = vmatpush1.msra.mxu0 %v1687
  %1794 = vmatprep.subr.mxu0 0.0
  %1795 = vmatpush1.msra.mxu0 %v1686
  %1796 = vmatprep.subr.mxu0 0.0
  %1797 = vmatpush1.msra.mxu0 %v1685
  %1798 = vmatprep.subr.mxu0 0.0
  %1799 = vmatpush1.msra.mxu0 %v1684
  %1800 = vmatprep.subr.mxu0 0.0
  %1801 = vmatpush1.msra.mxu0 %v1683
  %1802 = vmatprep.subr.mxu0 0.0
  %1803 = vmatpush1.msra.mxu0 %v1682
  %1804 = vmatprep.subr.mxu0 0.0
  %1805 = vmatpush1.msra.mxu0 %v1681
  %1806 = vmatprep.subr.mxu0 0.0
  %1807 = vmatpush1.msra.mxu0 %v1680
  %1808 = vmatprep.subr.mxu0 0.0
  %1809 = vmatpush1.msra.mxu0 %v1679
  %1810 = vmatprep.subr.mxu0 0.0
  %1811 = vmatpush1.msra.mxu0 %v1678
  %1812 = vmatprep.subr.mxu0 0.0
  %1813 = vmatpush1.msra.mxu0 %v1677
  %1814 = vmatprep.subr.mxu0 0.0
  %1815 = vmatpush1.msra.mxu0 %v1676
  %1816 = vmatprep.subr.mxu0 0.0
  %1817 = vmatpush1.msra.mxu0 %v1675
  %1818 = vmatprep.subr.mxu0 0.0
  %1819 = vmatpush1.msra.mxu0 %v1674
  %1820 = vmatprep.subr.mxu0 0.0
  %1821 = vmatpush1.msra.mxu0 %v1673
  %1822 = vmatprep.subr.mxu0 0.0
  %1823 = vmatpush2.msra.mxu0 %v1704
  %1824 = vmatprep.subr.mxu0 0.0
  %1825 = vmatpush2.msra.mxu0 %v1703
  %1826 = vmatprep.subr.mxu0 0.0
  %1827 = vmatpush2.msra.mxu0 %v1702
  %1828 = vmatprep.subr.mxu0 0.0
  %1829 = vmatpush2.msra.mxu0 %v1701
  %1830 = vmatprep.subr.mxu0 0.0
  %1831 = vmatpush2.msra.mxu0 %v1700
  %1832 = vmatprep.subr.mxu0 0.0
  %1833 = vmatpush2.msra.mxu0 %v1699
  %1834 = vmatprep.subr.mxu0 0.0
  %1835 = vmatpush2.msra.mxu0 %v1698
  %1836 = vmatprep.subr.mxu0 0.0
  %1837 = vmatpush2.msra.mxu0 %v1697
  %1838 = vmatprep.subr.mxu0 0.0
  %1839 = vmatpush2.msra.mxu0 %v1696
  %1840 = vmatprep.subr.mxu0 0.0
  %1841 = vmatpush2.msra.mxu0 %v1695
  %1842 = vmatprep.subr.mxu0 0.0
  %1843 = vmatpush2.msra.mxu0 %v1694
  %1844 = vmatprep.subr.mxu0 0.0
  %1845 = vmatpush2.msra.mxu0 %v1693
  %1846 = vmatprep.subr.mxu0 0.0
  %1847 = vmatpush2.msra.mxu0 %v1692
  %1848 = vmatprep.subr.mxu0 0.0
  %1849 = vmatpush2.msra.mxu0 %v1691
  %1850 = vmatprep.subr.mxu0 0.0
  %1851 = vmatpush2.msra.mxu0 %v1690
  %1852 = vmatprep.subr.mxu0 0.0
  %1853 = vmatpush2.msra.mxu0 %v1689
  %1854 = vmatprep.mubr.f32.mxu0 %v1628
  %1855 = vmatmul.mubr.f32.gmra.mxu0 %v1627
  %v1856 = vpop.f32.mrf.mxu0
  %v1857 = vadd.f32 %v1772, %v1856
  %v1858 = vpop.f32.mrf.mxu0
  %1859 = vmatprep.mubr.f32.mxu0 %v1632
  %1860 = vmatmul.mubr.f32.gmra.mxu0 %v1631
  %v1861 = vpop.f32.mrf.mxu0
  %v1862 = vadd.f32 %v1777, %v1861
  %v1863 = vpop.f32.mrf.mxu0
  %1864 = vmatprep.mubr.f32.mxu0 %v1636
  %1865 = vmatmul.mubr.f32.gmra.mxu0 %v1635
  %v1866 = vpop.f32.mrf.mxu0
  %v1867 = vadd.f32 %v1782, %v1866
  %v1868 = vpop.f32.mrf.mxu0
  %1869 = vmatprep.mubr.f32.mxu0 %v1640
  %1870 = vmatmul.mubr.f32.gmra.mxu0 %v1639
  %v1871 = vpop.f32.mrf.mxu0
  %v1872 = vadd.f32 %v1787, %v1871
  %v1873 = vpop.f32.mrf.mxu0
  %1874 = vdwg.mxu0
  %1876 = vset.pattern.permute.xlu0 32
  %1877 = vperm.xlu0 %1876, %v40
  %v1878 = vpop.permute.xlu0 %1877
  %vm1880 = vcmask 261120
  %v1881 = vsel %vm1880, %v40, 0
  %1883 = vmatprep.subr.mxu0 0.0
  %1884 = vmatpush1.msra.mxu0 0.0
  %1885 = vmatprep.subr.mxu0 0.0
  %1886 = vmatpush1.msra.mxu0 0.0
  %1887 = vmatprep.subr.mxu0 0.0
  %1888 = vmatpush1.msra.mxu0 0.0
  %1889 = vmatprep.subr.mxu0 0.0
  %1890 = vmatpush1.msra.mxu0 0.0
  %1891 = vmatprep.subr.mxu0 0.0
  %1892 = vmatpush1.msra.mxu0 0.0
  %1893 = vmatprep.subr.mxu0 0.0
  %1894 = vmatpush1.msra.mxu0 0.0
  %1895 = vmatprep.subr.mxu0 0.0
  %1896 = vmatpush1.msra.mxu0 0.0
  %1897 = vmatprep.subr.mxu0 0.0
  %1898 = vmatpush1.msra.mxu0 0.0
  %1899 = vmatprep.subr.mxu0 0.0
  %1900 = vmatpush1.msra.mxu0 0.0
  %1901 = vmatprep.subr.mxu0 0.0
  %1902 = vmatpush1.msra.mxu0 0.0
  %1903 = vmatprep.subr.mxu0 0.0
  %1904 = vmatpush1.msra.mxu0 0.0
  %1905 = vmatprep.subr.mxu0 0.0
  %1906 = vmatpush1.msra.mxu0 0.0
  %1907 = vmatprep.subr.mxu0 0.0
  %1908 = vmatpush1.msra.mxu0 %v1872
  %1909 = vmatprep.subr.mxu0 0.0
  %1910 = vmatpush1.msra.mxu0 %v1867
  %1911 = vmatprep.subr.mxu0 0.0
  %1912 = vmatpush1.msra.mxu0 %v1862
  %1913 = vmatprep.subr.mxu0 0.0
  %1914 = vmatpush1.msra.mxu0 %v1857
  %1915 = vmatprep.subr.mxu0 0.0
  %1916 = vmatpush2.msra.mxu0 0.0
  %1917 = vmatprep.subr.mxu0 0.0
  %1918 = vmatpush2.msra.mxu0 0.0
  %1919 = vmatprep.subr.mxu0 0.0
  %1920 = vmatpush2.msra.mxu0 0.0
  %1921 = vmatprep.subr.mxu0 0.0
  %1922 = vmatpush2.msra.mxu0 0.0
  %1923 = vmatprep.subr.mxu0 0.0
  %1924 = vmatpush2.msra.mxu0 0.0
  %1925 = vmatprep.subr.mxu0 0.0
  %1926 = vmatpush2.msra.mxu0 0.0
  %1927 = vmatprep.subr.mxu0 0.0
  %1928 = vmatpush2.msra.mxu0 0.0
  %1929 = vmatprep.subr.mxu0 0.0
  %1930 = vmatpush2.msra.mxu0 0.0
  %1931 = vmatprep.subr.mxu0 0.0
  %1932 = vmatpush2.msra.mxu0 0.0
  %1933 = vmatprep.subr.mxu0 0.0
  %1934 = vmatpush2.msra.mxu0 0.0
  %1935 = vmatprep.subr.mxu0 0.0
  %1936 = vmatpush2.msra.mxu0 0.0
  %1937 = vmatprep.subr.mxu0 0.0
  %1938 = vmatpush2.msra.mxu0 0.0
  %1939 = vmatprep.subr.mxu0 0.0
  %1940 = vmatpush2.msra.mxu0 0.0
  %1941 = vmatprep.subr.mxu0 0.0
  %1942 = vmatpush2.msra.mxu0 0.0
  %1943 = vmatprep.subr.mxu0 0.0
  %1944 = vmatpush2.msra.mxu0 0.0
  %1945 = vmatprep.subr.mxu0 0.0
  %1946 = vmatpush2.msra.mxu0 0.0
  %1947 = vmatprep.mubr.f32.mxu0 0.0
  %1948 = vmatmul.mubr.f32.gmra.mxu0 %v1881
  %v1949 = vpop.f32.mrf.mxu0
  %v1950 = vadd.f32 %v1878, %v1949
  %v1951 = vpop.f32.mrf.mxu0
  %1952 = vdwg.mxu0
  %v1953 = vxor.u32 %v1950, 2147483648
  %v1954 = vmul.f32 %v1953, 1.442695
  %v1955 = vpow.pop %v1954
  %v1956 = vadd.f32 %v1955, 1.0
  %v1957 = vrcp.pop %v1956
  %v1958 = vmul.f32 1.0, %v1957
  %v1959 = vmul.f32 %v1950, %v1958
  %1960 = vset.pattern.permute.xlu0 2
  %1961 = vperm.xlu0 %1960, %v36
  %v1962 = vpop.permute.xlu0 %1961
  %1964 = vset.pattern.permute.xlu0 2
  %1965 = vperm.xlu0 %1964, %v37
  %v1966 = vpop.permute.xlu0 %1965
  %1968 = vset.pattern.permute.xlu0 2
  %1969 = vperm.xlu0 %1968, %v38
  %v1970 = vpop.permute.xlu0 %1969
  %1972 = vset.pattern.permute.xlu0 2
  %1973 = vperm.xlu0 %1972, %v39
  %v1974 = vpop.permute.xlu0 %1973
  %1976 = vrot.lane.b32.xlu0 %v36, 124
  %v1977 = vpop.permute.xlu0 %1976
  %1978 = vrot.lane.b32.xlu0 %v37, 124
  %v1979 = vpop.permute.xlu0 %1978
  %1980 = vrot.lane.b32.xlu0 %v38, 124
  %v1981 = vpop.permute.xlu0 %1980
  %1982 = vrot.lane.b32.xlu0 %v39, 124
  %v1983 = vpop.permute.xlu0 %1982
  %v1984 = vsel %vm65, %v1977, 0
  %v1986 = vsel %vm65, %v1979, 0
  %v1988 = vsel %vm65, %v1981, 0
  %v1990 = vsel %vm65, %v1983, 0
  %1992 = vmatprep.subr.mxu0 0.0
  %1993 = vmatpush1.msra.mxu0 0.0
  %1994 = vmatprep.subr.mxu0 0.0
  %1995 = vmatpush1.msra.mxu0 0.0
  %1996 = vmatprep.subr.mxu0 0.0
  %1997 = vmatpush1.msra.mxu0 0.0
  %1998 = vmatprep.subr.mxu0 0.0
  %1999 = vmatpush1.msra.mxu0 0.0
  %2000 = vmatprep.subr.mxu0 0.0
  %2001 = vmatpush1.msra.mxu0 0.0
  %2002 = vmatprep.subr.mxu0 0.0
  %2003 = vmatpush1.msra.mxu0 0.0
  %2004 = vmatprep.subr.mxu0 0.0
  %2005 = vmatpush1.msra.mxu0 0.0
  %2006 = vmatprep.subr.mxu0 0.0
  %2007 = vmatpush1.msra.mxu0 0.0
  %2008 = vmatprep.subr.mxu0 0.0
  %2009 = vmatpush1.msra.mxu0 0.0
  %2010 = vmatprep.subr.mxu0 0.0
  %2011 = vmatpush1.msra.mxu0 0.0
  %2012 = vmatprep.subr.mxu0 0.0
  %2013 = vmatpush1.msra.mxu0 0.0
  %2014 = vmatprep.subr.mxu0 0.0
  %2015 = vmatpush1.msra.mxu0 0.0
  %2016 = vmatprep.subr.mxu0 0.0
  %2017 = vmatpush1.msra.mxu0 0.0
  %2018 = vmatprep.subr.mxu0 0.0
  %2019 = vmatpush1.msra.mxu0 0.0
  %2020 = vmatprep.subr.mxu0 0.0
  %2021 = vmatpush1.msra.mxu0 0.0
  %2022 = vmatprep.subr.mxu0 0.0
  %2023 = vmatpush1.msra.mxu0 %v1959
  %2024 = vmatprep.subr.mxu0 0.0
  %2025 = vmatpush2.msra.mxu0 0.0
  %2026 = vmatprep.subr.mxu0 0.0
  %2027 = vmatpush2.msra.mxu0 0.0
  %2028 = vmatprep.subr.mxu0 0.0
  %2029 = vmatpush2.msra.mxu0 0.0
  %2030 = vmatprep.subr.mxu0 0.0
  %2031 = vmatpush2.msra.mxu0 0.0
  %2032 = vmatprep.subr.mxu0 0.0
  %2033 = vmatpush2.msra.mxu0 0.0
  %2034 = vmatprep.subr.mxu0 0.0
  %2035 = vmatpush2.msra.mxu0 0.0
  %2036 = vmatprep.subr.mxu0 0.0
  %2037 = vmatpush2.msra.mxu0 0.0
  %2038 = vmatprep.subr.mxu0 0.0
  %2039 = vmatpush2.msra.mxu0 0.0
  %2040 = vmatprep.subr.mxu0 0.0
  %2041 = vmatpush2.msra.mxu0 0.0
  %2042 = vmatprep.subr.mxu0 0.0
  %2043 = vmatpush2.msra.mxu0 0.0
  %2044 = vmatprep.subr.mxu0 0.0
  %2045 = vmatpush2.msra.mxu0 0.0
  %2046 = vmatprep.subr.mxu0 0.0
  %2047 = vmatpush2.msra.mxu0 0.0
  %2048 = vmatprep.subr.mxu0 0.0
  %2049 = vmatpush2.msra.mxu0 0.0
  %2050 = vmatprep.subr.mxu0 0.0
  %2051 = vmatpush2.msra.mxu0 0.0
  %2052 = vmatprep.subr.mxu0 0.0
  %2053 = vmatpush2.msra.mxu0 0.0
  %2054 = vmatprep.subr.mxu0 0.0
  %2055 = vmatpush2.msra.mxu0 0.0
  %2056 = vmatprep.mubr.f32.mxu0 0.0
  %2057 = vmatmul.mubr.f32.gmra.mxu0 %v1984
  %v2058 = vpop.f32.mrf.mxu0
  %v2059 = vadd.f32 %v1962, %v2058
  %v2060 = vpop.f32.mrf.mxu0
  %2061 = vmatprep.mubr.f32.mxu0 0.0
  %2062 = vmatmul.mubr.f32.gmra.mxu0 %v1986
  %v2063 = vpop.f32.mrf.mxu0
  %v2064 = vadd.f32 %v1966, %v2063
  %v2065 = vpop.f32.mrf.mxu0
  %2066 = vmatprep.mubr.f32.mxu0 0.0
  %2067 = vmatmul.mubr.f32.gmra.mxu0 %v1988
  %v2068 = vpop.f32.mrf.mxu0
  %v2069 = vadd.f32 %v1970, %v2068
  %v2070 = vpop.f32.mrf.mxu0
  %2071 = vmatprep.mubr.f32.mxu0 0.0
  %2072 = vmatmul.mubr.f32.gmra.mxu0 %v1990
  %v2073 = vpop.f32.mrf.mxu0
  %v2074 = vadd.f32 %v1974, %v2073
  %v2075 = vpop.f32.mrf.mxu0
  %2076 = vdwg.mxu0
  %v2077 = vxor.u32 %v2059, 2147483648
  %v2078 = vxor.u32 %v2064, 2147483648
  %v2079 = vxor.u32 %v2069, 2147483648
  %v2080 = vxor.u32 %v2074, 2147483648
  %v2081 = vmul.f32 %v2077, 1.442695
  %v2082 = vpow.pop %v2081
  %v2083 = vmul.f32 %v2078, 1.442695
  %v2084 = vpow.pop %v2083
  %v2085 = vmul.f32 %v2079, 1.442695
  %v2086 = vpow.pop %v2085
  %v2087 = vmul.f32 %v2080, 1.442695
  %v2088 = vpow.pop %v2087
  %v2089 = vadd.f32 %v2082, 1.0
  %v2090 = vadd.f32 %v2084, 1.0
  %v2091 = vadd.f32 %v2086, 1.0
  %v2092 = vadd.f32 %v2088, 1.0
  %v2093 = vrcp.pop %v2089
  %v2094 = vmul.f32 1.0, %v2093
  %v2095 = vrcp.pop %v2090
  %v2096 = vmul.f32 1.0, %v2095
  %v2097 = vrcp.pop %v2091
  %v2098 = vmul.f32 1.0, %v2097
  %v2099 = vrcp.pop %v2092
  %v2100 = vmul.f32 1.0, %v2099
  %v2101 = vld [vmem:[%s8] sm:$0xff]
  %v2102 = vld [vmem:[%s8 + $0x8] sm:$0xff]
  %v2103 = vld [vmem:[%s8 + $0x10] sm:$0xff]
  %v2104 = vld [vmem:[%s8 + $0x18] sm:$0xff]
  %v2106 = vsel %vm65, %v2094, 0
  %v2109 = vsel %vm65, %v2096, 0
  %v2112 = vsel %vm65, %v2098, 0
  %v2115 = vsel %vm65, %v2100, 0
  %2117 = vmatprep.subr.mxu0 0.0
  %2118 = vmatpush1.msra.mxu0 0.0
  %2119 = vmatprep.subr.mxu0 0.0
  %2120 = vmatpush1.msra.mxu0 0.0
  %2121 = vmatprep.subr.mxu0 0.0
  %2122 = vmatpush1.msra.mxu0 0.0
  %2123 = vmatprep.subr.mxu0 0.0
  %2124 = vmatpush1.msra.mxu0 0.0
  %2125 = vmatprep.subr.mxu0 0.0
  %2126 = vmatpush1.msra.mxu0 0.0
  %2127 = vmatprep.subr.mxu0 0.0
  %2128 = vmatpush1.msra.mxu0 0.0
  %2129 = vmatprep.subr.mxu0 0.0
  %2130 = vmatpush1.msra.mxu0 0.0
  %2131 = vmatprep.subr.mxu0 0.0
  %2132 = vmatpush1.msra.mxu0 0.0
  %2133 = vmatprep.subr.mxu0 0.0
  %2134 = vmatpush1.msra.mxu0 0.0
  %2135 = vmatprep.subr.mxu0 0.0
  %2136 = vmatpush1.msra.mxu0 0.0
  %2137 = vmatprep.subr.mxu0 0.0
  %2138 = vmatpush1.msra.mxu0 0.0
  %2139 = vmatprep.subr.mxu0 0.0
  %2140 = vmatpush1.msra.mxu0 0.0
  %2141 = vmatprep.subr.mxu0 0.0
  %2142 = vmatpush1.msra.mxu0 0.0
  %2143 = vmatprep.subr.mxu0 0.0
  %2144 = vmatpush1.msra.mxu0 0.0
  %2145 = vmatprep.subr.mxu0 0.0
  %2146 = vmatpush1.msra.mxu0 0.0
  %2147 = vmatprep.subr.mxu0 %v2102
  %2148 = vmatpush1.msra.mxu0 %v2101
  %2149 = vmatprep.subr.mxu0 0.0
  %2150 = vmatpush2.msra.mxu0 0.0
  %2151 = vmatprep.subr.mxu0 0.0
  %2152 = vmatpush2.msra.mxu0 0.0
  %2153 = vmatprep.subr.mxu0 0.0
  %2154 = vmatpush2.msra.mxu0 0.0
  %2155 = vmatprep.subr.mxu0 0.0
  %2156 = vmatpush2.msra.mxu0 0.0
  %2157 = vmatprep.subr.mxu0 0.0
  %2158 = vmatpush2.msra.mxu0 0.0
  %2159 = vmatprep.subr.mxu0 0.0
  %2160 = vmatpush2.msra.mxu0 0.0
  %2161 = vmatprep.subr.mxu0 0.0
  %2162 = vmatpush2.msra.mxu0 0.0
  %2163 = vmatprep.subr.mxu0 0.0
  %2164 = vmatpush2.msra.mxu0 0.0
  %2165 = vmatprep.subr.mxu0 0.0
  %2166 = vmatpush2.msra.mxu0 0.0
  %2167 = vmatprep.subr.mxu0 0.0
  %2168 = vmatpush2.msra.mxu0 0.0
  %2169 = vmatprep.subr.mxu0 0.0
  %2170 = vmatpush2.msra.mxu0 0.0
  %2171 = vmatprep.subr.mxu0 0.0
  %2172 = vmatpush2.msra.mxu0 0.0
  %2173 = vmatprep.subr.mxu0 0.0
  %2174 = vmatpush2.msra.mxu0 0.0
  %2175 = vmatprep.subr.mxu0 0.0
  %2176 = vmatpush2.msra.mxu0 0.0
  %2177 = vmatprep.subr.mxu0 0.0
  %2178 = vmatpush2.msra.mxu0 0.0
  %2179 = vmatprep.subr.mxu0 0.0
  %2180 = vmatpush2.msra.mxu0 0.0
  %2181 = vmatprep.mubr.f32.mxu0 0.0
  %2182 = vmatmul.mubr.f32.gmra.mxu0 %v2106
  %v2183 = vpop.f32.mrf.mxu0
  %v2184 = vadd.f32 0.0, %v2183
  %v2185 = vpop.f32.mrf.mxu0
  %v2186 = vadd.f32 0.0, %v2185
  %2187 = vmatprep.mubr.f32.mxu0 0.0
  %2188 = vmatmul.mubr.f32.gmra.mxu0 %v2109
  %v2189 = vpop.f32.mrf.mxu0
  %v2190 = vadd.f32 0.0, %v2189
  %v2191 = vpop.f32.mrf.mxu0
  %v2192 = vadd.f32 0.0, %v2191
  %2193 = vmatprep.mubr.f32.mxu0 0.0
  %2194 = vmatmul.mubr.f32.gmra.mxu0 %v2112
  %v2195 = vpop.f32.mrf.mxu0
  %v2196 = vadd.f32 0.0, %v2195
  %v2197 = vpop.f32.mrf.mxu0
  %v2198 = vadd.f32 0.0, %v2197
  %2199 = vmatprep.mubr.f32.mxu0 0.0
  %2200 = vmatmul.mubr.f32.gmra.mxu0 %v2115
  %v2201 = vpop.f32.mrf.mxu0
  %v2202 = vadd.f32 0.0, %v2201
  %v2203 = vpop.f32.mrf.mxu0
  %v2204 = vadd.f32 0.0, %v2203
  %2205 = vdwg.mxu0
  %2206 = vmatprep.subr.mxu0 0.0
  %2207 = vmatpush1.msra.mxu0 0.0
  %2208 = vmatprep.subr.mxu0 0.0
  %2209 = vmatpush1.msra.mxu0 0.0
  %2210 = vmatprep.subr.mxu0 0.0
  %2211 = vmatpush1.msra.mxu0 0.0
  %2212 = vmatprep.subr.mxu0 0.0
  %2213 = vmatpush1.msra.mxu0 0.0
  %2214 = vmatprep.subr.mxu0 0.0
  %2215 = vmatpush1.msra.mxu0 0.0
  %2216 = vmatprep.subr.mxu0 0.0
  %2217 = vmatpush1.msra.mxu0 0.0
  %2218 = vmatprep.subr.mxu0 0.0
  %2219 = vmatpush1.msra.mxu0 0.0
  %2220 = vmatprep.subr.mxu0 0.0
  %2221 = vmatpush1.msra.mxu0 0.0
  %2222 = vmatprep.subr.mxu0 0.0
  %2223 = vmatpush1.msra.mxu0 0.0
  %2224 = vmatprep.subr.mxu0 0.0
  %2225 = vmatpush1.msra.mxu0 0.0
  %2226 = vmatprep.subr.mxu0 0.0
  %2227 = vmatpush1.msra.mxu0 0.0
  %2228 = vmatprep.subr.mxu0 0.0
  %2229 = vmatpush1.msra.mxu0 0.0
  %2230 = vmatprep.subr.mxu0 0.0
  %2231 = vmatpush1.msra.mxu0 0.0
  %2232 = vmatprep.subr.mxu0 0.0
  %2233 = vmatpush1.msra.mxu0 0.0
  %2234 = vmatprep.subr.mxu0 0.0
  %2235 = vmatpush1.msra.mxu0 0.0
  %2236 = vmatprep.subr.mxu0 %v2104
  %2237 = vmatpush1.msra.mxu0 %v2103
  %2238 = vmatprep.subr.mxu0 0.0
  %2239 = vmatpush2.msra.mxu0 0.0
  %2240 = vmatprep.subr.mxu0 0.0
  %2241 = vmatpush2.msra.mxu0 0.0
  %2242 = vmatprep.subr.mxu0 0.0
  %2243 = vmatpush2.msra.mxu0 0.0
  %2244 = vmatprep.subr.mxu0 0.0
  %2245 = vmatpush2.msra.mxu0 0.0
  %2246 = vmatprep.subr.mxu0 0.0
  %2247 = vmatpush2.msra.mxu0 0.0
  %2248 = vmatprep.subr.mxu0 0.0
  %2249 = vmatpush2.msra.mxu0 0.0
  %2250 = vmatprep.subr.mxu0 0.0
  %2251 = vmatpush2.msra.mxu0 0.0
  %2252 = vmatprep.subr.mxu0 0.0
  %2253 = vmatpush2.msra.mxu0 0.0
  %2254 = vmatprep.subr.mxu0 0.0
  %2255 = vmatpush2.msra.mxu0 0.0
  %2256 = vmatprep.subr.mxu0 0.0
  %2257 = vmatpush2.msra.mxu0 0.0
  %2258 = vmatprep.subr.mxu0 0.0
  %2259 = vmatpush2.msra.mxu0 0.0
  %2260 = vmatprep.subr.mxu0 0.0
  %2261 = vmatpush2.msra.mxu0 0.0
  %2262 = vmatprep.subr.mxu0 0.0
  %2263 = vmatpush2.msra.mxu0 0.0
  %2264 = vmatprep.subr.mxu0 0.0
  %2265 = vmatpush2.msra.mxu0 0.0
  %2266 = vmatprep.subr.mxu0 0.0
  %2267 = vmatpush2.msra.mxu0 0.0
  %2268 = vmatprep.subr.mxu0 0.0
  %2269 = vmatpush2.msra.mxu0 0.0
  %2270 = vmatprep.mubr.f32.mxu0 0.0
  %2271 = vmatmul.mubr.f32.gmra.mxu0 %v2106
  %v2272 = vpop.f32.mrf.mxu0
  %v2273 = vadd.f32 0.0, %v2272
  %v2274 = vpop.f32.mrf.mxu0
  %v2275 = vadd.f32 0.0, %v2274
  %2276 = vmatprep.mubr.f32.mxu0 0.0
  %2277 = vmatmul.mubr.f32.gmra.mxu0 %v2109
  %v2278 = vpop.f32.mrf.mxu0
  %v2279 = vadd.f32 0.0, %v2278
  %v2280 = vpop.f32.mrf.mxu0
  %v2281 = vadd.f32 0.0, %v2280
  %2282 = vmatprep.mubr.f32.mxu0 0.0
  %2283 = vmatmul.mubr.f32.gmra.mxu0 %v2112
  %v2284 = vpop.f32.mrf.mxu0
  %v2285 = vadd.f32 0.0, %v2284
  %v2286 = vpop.f32.mrf.mxu0
  %v2287 = vadd.f32 0.0, %v2286
  %2288 = vmatprep.mubr.f32.mxu0 0.0
  %2289 = vmatmul.mubr.f32.gmra.mxu0 %v2115
  %v2290 = vpop.f32.mrf.mxu0
  %v2291 = vadd.f32 0.0, %v2290
  %v2292 = vpop.f32.mrf.mxu0
  %v2293 = vadd.f32 0.0, %v2292
  %2294 = vdwg.mxu0
  %v2295 = vmul.f32 %v1625, %v2184
  %v2296 = vmul.f32 %v1626, %v2186
  %v2297 = vmul.f32 %v1627, %v2273
  %v2298 = vmul.f32 %v1628, %v2275
  %v2299 = vmul.f32 %v1629, %v2190
  %v2300 = vmul.f32 %v1630, %v2192
  %v2301 = vmul.f32 %v1631, %v2279
  %v2302 = vmul.f32 %v1632, %v2281
  %v2303 = vmul.f32 %v1633, %v2196
  %v2304 = vmul.f32 %v1634, %v2198
  %v2305 = vmul.f32 %v1635, %v2285
  %v2306 = vmul.f32 %v1636, %v2287
  %v2307 = vmul.f32 %v1637, %v2202
  %v2308 = vmul.f32 %v1638, %v2204
  %v2309 = vmul.f32 %v1639, %v2291
  %v2310 = vmul.f32 %v1640, %v2293
  %v2311 = vld [vmem:[%s6] sm:$0xff]
  %2312 = vset.pattern.permute.xlu0 3
  %2313 = vperm.xlu0 %2312, %v36
  %v2314 = vpop.permute.xlu0 %2313
  %v2317 = vsel %vm1880, %v2311, 0
  %2319 = vmatprep.subr.mxu0 0.0
  %2320 = vmatpush1.msra.mxu0 0.0
  %2321 = vmatprep.subr.mxu0 0.0
  %2322 = vmatpush1.msra.mxu0 0.0
  %2323 = vmatprep.subr.mxu0 0.0
  %2324 = vmatpush1.msra.mxu0 0.0
  %2325 = vmatprep.subr.mxu0 0.0
  %2326 = vmatpush1.msra.mxu0 0.0
  %2327 = vmatprep.subr.mxu0 0.0
  %2328 = vmatpush1.msra.mxu0 0.0
  %2329 = vmatprep.subr.mxu0 0.0
  %2330 = vmatpush1.msra.mxu0 0.0
  %2331 = vmatprep.subr.mxu0 0.0
  %2332 = vmatpush1.msra.mxu0 0.0
  %2333 = vmatprep.subr.mxu0 0.0
  %2334 = vmatpush1.msra.mxu0 0.0
  %2335 = vmatprep.subr.mxu0 0.0
  %2336 = vmatpush1.msra.mxu0 0.0
  %2337 = vmatprep.subr.mxu0 0.0
  %2338 = vmatpush1.msra.mxu0 0.0
  %2339 = vmatprep.subr.mxu0 0.0
  %2340 = vmatpush1.msra.mxu0 0.0
  %2341 = vmatprep.subr.mxu0 0.0
  %2342 = vmatpush1.msra.mxu0 0.0
  %2343 = vmatprep.subr.mxu0 %v2308
  %2344 = vmatpush1.msra.mxu0 %v2307
  %2345 = vmatprep.subr.mxu0 %v2304
  %2346 = vmatpush1.msra.mxu0 %v2303
  %2347 = vmatprep.subr.mxu0 %v2300
  %2348 = vmatpush1.msra.mxu0 %v2299
  %2349 = vmatprep.subr.mxu0 %v2296
  %2350 = vmatpush1.msra.mxu0 %v2295
  %2351 = vmatprep.subr.mxu0 0.0
  %2352 = vmatpush2.msra.mxu0 0.0
  %2353 = vmatprep.subr.mxu0 0.0
  %2354 = vmatpush2.msra.mxu0 0.0
  %2355 = vmatprep.subr.mxu0 0.0
  %2356 = vmatpush2.msra.mxu0 0.0
  %2357 = vmatprep.subr.mxu0 0.0
  %2358 = vmatpush2.msra.mxu0 0.0
  %2359 = vmatprep.subr.mxu0 0.0
  %2360 = vmatpush2.msra.mxu0 0.0
  %2361 = vmatprep.subr.mxu0 0.0
  %2362 = vmatpush2.msra.mxu0 0.0
  %2363 = vmatprep.subr.mxu0 0.0
  %2364 = vmatpush2.msra.mxu0 0.0
  %2365 = vmatprep.subr.mxu0 0.0
  %2366 = vmatpush2.msra.mxu0 0.0
  %2367 = vmatprep.subr.mxu0 0.0
  %2368 = vmatpush2.msra.mxu0 0.0
  %2369 = vmatprep.subr.mxu0 0.0
  %2370 = vmatpush2.msra.mxu0 0.0
  %2371 = vmatprep.subr.mxu0 0.0
  %2372 = vmatpush2.msra.mxu0 0.0
  %2373 = vmatprep.subr.mxu0 0.0
  %2374 = vmatpush2.msra.mxu0 0.0
  %2375 = vmatprep.subr.mxu0 0.0
  %2376 = vmatpush2.msra.mxu0 0.0
  %2377 = vmatprep.subr.mxu0 0.0
  %2378 = vmatpush2.msra.mxu0 0.0
  %2379 = vmatprep.subr.mxu0 0.0
  %2380 = vmatpush2.msra.mxu0 0.0
  %2381 = vmatprep.subr.mxu0 0.0
  %2382 = vmatpush2.msra.mxu0 0.0
  %2383 = vmatprep.mubr.f32.mxu0 0.0
  %2384 = vmatmul.mubr.f32.gmra.mxu0 %v2317
  %v2385 = vpop.f32.mrf.mxu0
  %v2386 = vadd.f32 %v2314, %v2385
  %v2387 = vpop.f32.mrf.mxu0
  %v2388 = vadd.f32 %v2314, %v2387
  %2389 = vdwg.mxu0
  %2390 = vmatprep.subr.mxu0 0.0
  %2391 = vmatpush1.msra.mxu0 0.0
  %2392 = vmatprep.subr.mxu0 0.0
  %2393 = vmatpush1.msra.mxu0 0.0
  %2394 = vmatprep.subr.mxu0 0.0
  %2395 = vmatpush1.msra.mxu0 0.0
  %2396 = vmatprep.subr.mxu0 0.0
  %2397 = vmatpush1.msra.mxu0 0.0
  %2398 = vmatprep.subr.mxu0 0.0
  %2399 = vmatpush1.msra.mxu0 0.0
  %2400 = vmatprep.subr.mxu0 0.0
  %2401 = vmatpush1.msra.mxu0 0.0
  %2402 = vmatprep.subr.mxu0 0.0
  %2403 = vmatpush1.msra.mxu0 0.0
  %2404 = vmatprep.subr.mxu0 0.0
  %2405 = vmatpush1.msra.mxu0 0.0
  %2406 = vmatprep.subr.mxu0 0.0
  %2407 = vmatpush1.msra.mxu0 0.0
  %2408 = vmatprep.subr.mxu0 0.0
  %2409 = vmatpush1.msra.mxu0 0.0
  %2410 = vmatprep.subr.mxu0 0.0
  %2411 = vmatpush1.msra.mxu0 0.0
  %2412 = vmatprep.subr.mxu0 0.0
  %2413 = vmatpush1.msra.mxu0 0.0
  %2414 = vmatprep.subr.mxu0 %v2310
  %2415 = vmatpush1.msra.mxu0 %v2309
  %2416 = vmatprep.subr.mxu0 %v2306
  %2417 = vmatpush1.msra.mxu0 %v2305
  %2418 = vmatprep.subr.mxu0 %v2302
  %2419 = vmatpush1.msra.mxu0 %v2301
  %2420 = vmatprep.subr.mxu0 %v2298
  %2421 = vmatpush1.msra.mxu0 %v2297
  %2422 = vmatprep.subr.mxu0 0.0
  %2423 = vmatpush2.msra.mxu0 0.0
  %2424 = vmatprep.subr.mxu0 0.0
  %2425 = vmatpush2.msra.mxu0 0.0
  %2426 = vmatprep.subr.mxu0 0.0
  %2427 = vmatpush2.msra.mxu0 0.0
  %2428 = vmatprep.subr.mxu0 0.0
  %2429 = vmatpush2.msra.mxu0 0.0
  %2430 = vmatprep.subr.mxu0 0.0
  %2431 = vmatpush2.msra.mxu0 0.0
  %2432 = vmatprep.subr.mxu0 0.0
  %2433 = vmatpush2.msra.mxu0 0.0
  %2434 = vmatprep.subr.mxu0 0.0
  %2435 = vmatpush2.msra.mxu0 0.0
  %2436 = vmatprep.subr.mxu0 0.0
  %2437 = vmatpush2.msra.mxu0 0.0
  %2438 = vmatprep.subr.mxu0 0.0
  %2439 = vmatpush2.msra.mxu0 0.0
  %2440 = vmatprep.subr.mxu0 0.0
  %2441 = vmatpush2.msra.mxu0 0.0
  %2442 = vmatprep.subr.mxu0 0.0
  %2443 = vmatpush2.msra.mxu0 0.0
  %2444 = vmatprep.subr.mxu0 0.0
  %2445 = vmatpush2.msra.mxu0 0.0
  %2446 = vmatprep.subr.mxu0 0.0
  %2447 = vmatpush2.msra.mxu0 0.0
  %2448 = vmatprep.subr.mxu0 0.0
  %2449 = vmatpush2.msra.mxu0 0.0
  %2450 = vmatprep.subr.mxu0 0.0
  %2451 = vmatpush2.msra.mxu0 0.0
  %2452 = vmatprep.subr.mxu0 0.0
  %2453 = vmatpush2.msra.mxu0 0.0
  %2454 = vmatprep.mubr.f32.mxu0 0.0
  %2455 = vmatmul.mubr.f32.gmra.mxu0 %v2317
  %v2456 = vpop.f32.mrf.mxu0
  %v2457 = vadd.f32 %v2314, %v2456
  %v2458 = vpop.f32.mrf.mxu0
  %v2459 = vadd.f32 %v2314, %v2458
  %2460 = vdwg.mxu0
  %v2461 = vadd.f32 %v2386, %v32
  %v2462 = vadd.f32 %v2388, %v33
  %v2463 = vadd.f32 %v2457, %v34
  %v2464 = vadd.f32 %v2459, %v35
  %2465 = vst [vmem:[%s9] sm:$0xff] %v2461
  %2466 = vst [vmem:[%s9 + $0x8] sm:$0xff] %v2462
  %2467 = vst [vmem:[%s9 + $0x10] sm:$0xff] %v2463
  %2468 = vst [vmem:[%s9 + $0x18] sm:$0xff] %v2464
  // Predicated region
  $region38: #{mbconv_forward.1} parent=0 // pred_check
    _
  $region39: #{mbconv_forward.1} parent=0 // pred_check_branch
    %2470 = sbr.rel (0) target = $region41
  $region40: #{mbconv_forward.1} parent=0 // pred_region
    _
  $region41: #{mbconv_forward.1} parent=0 // pred_fallthru
    _
  // Predicated region
  $region42: #{mbconv_forward.1} parent=0 // pred_check
    _
  $region43: #{mbconv_forward.1} parent=0 // pred_check_branch
    %2472 = sbr.rel (0) target = $region45
  $region44: #{mbconv_forward.1} parent=0 // pred_region
    _
  $region45: #{mbconv_forward.1} parent=0 // pred_fallthru
    _

</llo_original>
